<compile_context>
chip_gen: v6e
topology: v6e:2x2x1
jax: 0.10.0
libtpu: 0.0.40
codegen_flags: <defaults>
</compile_context>

<pallas_src>
import functools

import jax
import jax.numpy as jnp
from jax.experimental import pallas as pl
from jax.experimental.pallas import tpu as pltpu


def _dsc_kernel(x_ref, wdw_ref, wpwt_ref, scale_ref, shift_ref, o_ref,
                xp_ref, lhs_ref, *, ksize, dilation, pad, h_out, w_out):
    # x_ref:     (Bt, Cin, H, W)        NCHW input block (no wrapper transform)
    # wdw_ref:   (K*K, Cin, 1, 1)       depthwise taps, broadcast-ready
    # wpwt_ref:  (Cout, Cin)            pointwise weights (transposed orientation)
    # scale_ref: (Cout, 1)              folded BN scale  = gamma / sqrt(var+eps)
    # shift_ref: (Cout, 1)              folded shift     = beta + scale*(Wpw@b_dw + b_pw - mean)
    # o_ref:     (Bt, Cout, H_out*W_out)  lane-dense, already NCHW-flat
    # xp_ref:    VMEM (Cin, H_pad, W_pad) zero-padded image scratch
    # lhs_ref:   VMEM (Cin, H_out*W_out)  flattened depthwise result (matmul RHS)
    bt, cin, h_in, w_in = x_ref.shape

    wpw_t = wpwt_ref[...].astype(jnp.float32)      # (Cout, Cin)  hoisted load
    scale = scale_ref[...]                         # (Cout, 1)
    shift = shift_ref[...]                         # (Cout, 1)

    # Zero the padded scratch once per grid step; only the interior is rewritten
    # per image, so the halo stays zero for every image in the block.
    xp_ref[...] = jnp.zeros(xp_ref.shape, xp_ref.dtype)

    for ib in range(bt):                           # static unroll over the batch block
        # Fill the interior of the padded image (single masked block store).
        xp_ref[:, pad:pad + h_in, pad:pad + w_in] = x_ref[ib].astype(xp_ref.dtype)
        xp = xp_ref[...]                           # (Cin, H_pad, W_pad) f32

        # ---- depthwise conv: K*K statically shifted taps, VPU MACs, f32 acc ----
        # kh slice hoisted out of the kw loop; taps are small (Cin in sublanes,
        # W in lanes) so the unavoidable shift/relayouts stay ~Cin-sized.
        acc = jnp.zeros((cin, h_out, w_out), jnp.float32)
        for kh in range(ksize):
            hs = xp[:, kh * dilation:kh * dilation + h_out, :]       # (Cin, H_out, W_pad)
            for kw in range(ksize):
                patch = hs[:, :, kw * dilation:kw * dilation + w_out]
                # Per-tap (Cin,1,1) weight read; kept as a ref index (instead of
                # one big hoisted load) so K*K*Cin near-empty vregs never stay live.
                w_t = wdw_ref[kh * ksize + kw]                        # (Cin, 1, 1)
                acc = acc + patch * w_t

        # ---- flatten spatial into the lane dim via the VMEM scratch -----------
        # (explicit row scatter: every lane of lhs_ref is written each image)
        for i in range(h_out):
            lhs_ref[:, i * w_out:(i + 1) * w_out] = acc[:, i, :]
        lhs = lhs_ref[...]                                            # (Cin, N)

        # ---- pointwise 1x1 conv on the MXU, lane dim = spatial (lane dense) ---
        y = jnp.dot(wpw_t, lhs, preferred_element_type=jnp.float32)  # (Cout, N)
        # folded BatchNorm (+ both conv biases) and ReLU
        y = jnp.maximum(y * scale + shift, 0.0)
        o_ref[ib] = y.astype(o_ref.dtype)


def _pick_bt(batch):
    # A few images per grid step amortizes the ~0.35us/step overhead, but keep
    # the grid length >= 2 so both v7x TensorCores get work.
    for bt in (8, 4, 2):
        if batch % bt == 0 and batch // bt >= 2:
            return bt
    return 1


def _pick_vmem_limit():
    try:
        cap = int(pltpu.get_tpu_info().vmem_capacity_bytes)
        return int(min((cap * 3) // 4, 112 << 20))   # leave headroom for scratch
    except Exception:
        return None                                   # compiler default


def dsc_pallas(x_nchw, w_dw, b_dw, w_pw, b_pw, gamma, beta,
               running_mean, running_var, *, padding, dilation, eps=1e-5):
    """Fused DSC forward (eval-mode BN), NCHW in / NCHW out.

    x_nchw: (B, Cin, H, W)     w_dw: (Cin, 1, K, K)    b_dw: (Cin,)
    w_pw:   (Cout, Cin, 1, 1)  b_pw: (Cout,)
    gamma/beta/running_mean/running_var: (Cout,)
    """
    B, Cin, H, W = x_nchw.shape
    K = int(w_dw.shape[-1])
    Cout = int(w_pw.shape[0])
    H_out = H + 2 * padding - dilation * (K - 1)
    W_out = W + 2 * padding - dilation * (K - 1)
    H_pad, W_pad = H + 2 * padding, W + 2 * padding
    N = H_out * W_out

    # Weight prep (tiny, O(Cin*Cout) work — no HBM pass over activations).
    wdw = jnp.transpose(w_dw[:, 0, :, :], (1, 2, 0))         # (K, K, Cin)
    wdw = wdw.reshape(K * K, Cin, 1, 1).astype(jnp.float32)  # broadcast-ready taps
    wpw_t = w_pw[:, :, 0, 0].astype(jnp.float32)             # (Cout, Cin)

    # Fold eval-mode BN + pointwise bias + (pushed-through) depthwise bias:
    #   out = scale*(Wpw @ dw) + [beta + scale*(Wpw @ b_dw + b_pw - mean)]
    inv_std = jax.lax.rsqrt(running_var.astype(jnp.float32) + eps)
    scale_v = gamma.astype(jnp.float32) * inv_std                          # (Cout,)
    shift_v = (beta.astype(jnp.float32)
               + scale_v * (wpw_t @ b_dw.astype(jnp.float32)
                            + b_pw.astype(jnp.float32)
                            - running_mean.astype(jnp.float32)))           # (Cout,)
    scale = scale_v.reshape(Cout, 1)
    shift = shift_v.reshape(Cout, 1)

    Bt = _pick_bt(B)
    grid = (B // Bt,)

    kernel = functools.partial(_dsc_kernel, ksize=K, dilation=dilation,
                               pad=padding, h_out=H_out, w_out=W_out)

    flops = 2 * B * H_out * W_out * Cin * (K * K + Cout) + 3 * B * Cout * N
    bytes_accessed = (x_nchw.size * x_nchw.dtype.itemsize
                      + wdw.size * 4 + wpw_t.size * 4 + scale.size * 4 + shift.size * 4
                      + B * Cout * N * x_nchw.dtype.itemsize)

    out_flat = pl.pallas_call(
        kernel,
        out_shape=jax.ShapeDtypeStruct((B, Cout, N), x_nchw.dtype),
        grid_spec=pltpu.PrefetchScalarGridSpec(
            num_scalar_prefetch=0,
            grid=grid,
            in_specs=[
                pl.BlockSpec((Bt, Cin, H, W), lambda b: (b, 0, 0, 0)),
                pl.BlockSpec((K * K, Cin, 1, 1), lambda b: (0, 0, 0, 0)),
                pl.BlockSpec((Cout, Cin), lambda b: (0, 0)),
                pl.BlockSpec((Cout, 1), lambda b: (0, 0)),
                pl.BlockSpec((Cout, 1), lambda b: (0, 0)),
            ],
            out_specs=pl.BlockSpec((Bt, Cout, N), lambda b: (b, 0, 0)),
            scratch_shapes=[
                pltpu.VMEM((Cin, H_pad, W_pad), jnp.float32),   # padded image
                pltpu.VMEM((Cin, N), jnp.float32),              # flattened dw result
            ],
        ),
        compiler_params=pltpu.CompilerParams(
            dimension_semantics=("parallel",),
            vmem_limit_bytes=_pick_vmem_limit(),
        ),
        cost_estimate=pl.CostEstimate(
            flops=flops, transcendentals=0, bytes_accessed=bytes_accessed),
    )(x_nchw, wdw, wpw_t, scale, shift)

    # (B, Cout, H_out*W_out) -> (B, Cout, H_out, W_out): contiguous, free reshape.
    return out_flat.reshape(B, Cout, H_out, W_out)


if __name__ == "__main__":
    key = jax.random.PRNGKey(0)
    ks = jax.random.split(key, 8)

    # Small shapes consistent with the module: batch=2, channels=4, spatial=16x16,
    # outchannels=8, kernel=3, padding=2, dilation=2 (output stays 16x16).
    B, Cin, H, W = 2, 4, 16, 16
    Cout, K, padding, dilation = 8, 3, 2, 2
    eps = 1e-5

    x = jax.random.normal(ks[0], (B, Cin, H, W), dtype=jnp.float32)
    w_dw = 0.2 * jax.random.normal(ks[1], (Cin, 1, K, K), dtype=jnp.float32)
    b_dw = 0.1 * jax.random.normal(ks[2], (Cin,), dtype=jnp.float32)
    w_pw = 0.2 * jax.random.normal(ks[3], (Cout, Cin, 1, 1), dtype=jnp.float32)
    b_pw = 0.1 * jax.random.normal(ks[4], (Cout,), dtype=jnp.float32)
    gamma = 1.0 + 0.1 * jax.random.normal(ks[5], (Cout,), dtype=jnp.float32)
    beta = 0.1 * jax.random.normal(ks[6], (Cout,), dtype=jnp.float32)
    running_mean = 0.1 * jax.random.normal(ks[7], (Cout,), dtype=jnp.float32)
    running_var = jnp.linspace(0.5, 1.5, Cout, dtype=jnp.float32)

    out = dsc_pallas(x, w_dw, b_dw, w_pw, b_pw, gamma, beta,
                     running_mean, running_var,
                     padding=padding, dilation=dilation, eps=eps)
    out = jax.block_until_ready(out)

    # Pure-JAX reference (same math as the PyTorch module in eval mode).
    dn = ("NCHW", "OIHW", "NCHW")
    ref = jax.lax.conv_general_dilated(
        x, w_dw, window_strides=(1, 1),
        padding=[(padding, padding), (padding, padding)],
        rhs_dilation=(dilation, dilation),
        dimension_numbers=dn, feature_group_count=Cin)
    ref = ref + b_dw.reshape(1, Cin, 1, 1)
    ref = jax.lax.conv_general_dilated(ref, w_pw, (1, 1), "VALID",
                                       dimension_numbers=dn)
    ref = ref + b_pw.reshape(1, Cout, 1, 1)
    ref = (gamma.reshape(1, Cout, 1, 1)
           * (ref - running_mean.reshape(1, Cout, 1, 1))
           / jnp.sqrt(running_var.reshape(1, Cout, 1, 1) + eps)
           + beta.reshape(1, Cout, 1, 1))
    ref = jnp.maximum(ref, 0.0)

    H_out = H + 2 * padding - dilation * (K - 1)
    W_out = W + 2 * padding - dilation * (K - 1)
    assert out.shape == (B, Cout, H_out, W_out)
    assert jnp.allclose(out, ref, atol=1e-3, rtol=1e-3), \
        float(jnp.max(jnp.abs(out - ref)))

    print("KERNEL_OK")
</pallas_src>

<mosaic_0001>
module attributes {stable_mosaic.version = 11 : i64} {
  func.func @_dsc_kernel(%arg0: i32, %arg1: memref<1x4x16x16xf32, #tpu.memory_space<vmem>>, %arg2: memref<9x4x1x1xf32, #tpu.memory_space<vmem>>, %arg3: memref<8x4xf32, #tpu.memory_space<vmem>>, %arg4: memref<8x1xf32, #tpu.memory_space<vmem>>, %arg5: memref<8x1xf32, #tpu.memory_space<vmem>>, %arg6: memref<1x8x256xf32, #tpu.memory_space<vmem>>, %arg7: memref<4x20x20xf32, #tpu.memory_space<vmem>>, %arg8: memref<4x256xf32, #tpu.memory_space<vmem>>) attributes {dimension_semantics = [#tpu.dimension_semantics<parallel>], iteration_bounds = array<i64: 2>, scalar_prefetch = 0 : i64, scratch_operands = 2 : i64, tpu.core_type = #tpu.core_type<tc>, window_params = [{transform_indices = @transform_0, window_bounds = array<i64: 1, 4, 16, 16>}, {pipeline_mode = #tpu.pipeline_mode<synchronous>, transform_indices = @transform_1, window_bounds = array<i64: 9, 4, 1, 1>}, {pipeline_mode = #tpu.pipeline_mode<synchronous>, transform_indices = @transform_2, window_bounds = array<i64: 8, 4>}, {pipeline_mode = #tpu.pipeline_mode<synchronous>, transform_indices = @transform_3, window_bounds = array<i64: 8, 1>}, {pipeline_mode = #tpu.pipeline_mode<synchronous>, transform_indices = @transform_4, window_bounds = array<i64: 8, 1>}, {transform_indices = @transform_5, window_bounds = array<i64: 1, 8, 256>}]} {
    %c0 = arith.constant 0 : index
    %c0_0 = arith.constant 0 : index
    %0 = vector.load %arg3[%c0, %c0_0] : memref<8x4xf32, #tpu.memory_space<vmem>>, vector<8x4xf32>
    %c0_1 = arith.constant 0 : index
    %c0_2 = arith.constant 0 : index
    %1 = vector.load %arg4[%c0_1, %c0_2] : memref<8x1xf32, #tpu.memory_space<vmem>>, vector<8x1xf32>
    %c0_3 = arith.constant 0 : index
    %c0_4 = arith.constant 0 : index
    %2 = vector.load %arg5[%c0_3, %c0_4] : memref<8x1xf32, #tpu.memory_space<vmem>>, vector<8x1xf32>
    %cst = arith.constant 0.000000e+00 : f32
    %3 = vector.broadcast %cst : f32 to vector<4x20x20xf32>
    %c0_5 = arith.constant 0 : index
    %c0_6 = arith.constant 0 : index
    %c0_7 = arith.constant 0 : index
    %4 = vector.load %arg7[%c0_5, %c0_6, %c0_7] : memref<4x20x20xf32, #tpu.memory_space<vmem>>, vector<4x20x20xf32>
    tpu.vector_store %arg7[%c0_5, %c0_6, %c0_7], %3 {strides = array<i32>} : memref<4x20x20xf32, #tpu.memory_space<vmem>>, vector<4x20x20xf32>,
    %c0_8 = arith.constant 0 : index
    %c0_9 = arith.constant 0 : index
    %c0_10 = arith.constant 0 : index
    %c0_11 = arith.constant 0 : index
    %5 = vector.load %arg1[%c0_8, %c0_9, %c0_10, %c0_11] : memref<1x4x16x16xf32, #tpu.memory_space<vmem>>, vector<1x4x16x16xf32>
    %6 = vector.shape_cast %5 : vector<1x4x16x16xf32> to vector<4x16x16xf32>
    %c0_12 = arith.constant 0 : index
    %c2 = arith.constant 2 : index
    %c2_13 = arith.constant 2 : index
    %7 = vector.load %arg7[%c0_12, %c2, %c2_13] : memref<4x20x20xf32, #tpu.memory_space<vmem>>, vector<4x16x16xf32>
    tpu.vector_store %arg7[%c0_12, %c2, %c2_13], %6 {strides = array<i32>} : memref<4x20x20xf32, #tpu.memory_space<vmem>>, vector<4x16x16xf32>,
    %c0_14 = arith.constant 0 : index
    %c0_15 = arith.constant 0 : index
    %c0_16 = arith.constant 0 : index
    %8 = vector.load %arg7[%c0_14, %c0_15, %c0_16] : memref<4x20x20xf32, #tpu.memory_space<vmem>>, vector<4x20x20xf32>
    %cst_17 = arith.constant 0.000000e+00 : f32
    %9 = vector.broadcast %cst_17 : f32 to vector<4x16x16xf32>
    %10 = vector.extract_strided_slice %8 {offsets = [0, 0, 0], sizes = [4, 16, 20], strides = [1, 1, 1]} : vector<4x20x20xf32> to vector<4x16x20xf32>
    %11 = vector.extract_strided_slice %10 {offsets = [0, 0, 0], sizes = [4, 16, 16], strides = [1, 1, 1]} : vector<4x16x20xf32> to vector<4x16x16xf32>
    %c0_18 = arith.constant 0 : index
    %c0_19 = arith.constant 0 : index
    %c0_20 = arith.constant 0 : index
    %c0_21 = arith.constant 0 : index
    %12 = vector.load %arg2[%c0_18, %c0_19, %c0_20, %c0_21] : memref<9x4x1x1xf32, #tpu.memory_space<vmem>>, vector<1x4x1x1xf32>
    %13 = vector.shape_cast %12 : vector<1x4x1x1xf32> to vector<4x1x1xf32>
    %14 = vector.broadcast %13 : vector<4x1x1xf32> to vector<4x16x16xf32>
    %15 = arith.mulf %11, %14 : vector<4x16x16xf32>
    %16 = arith.addf %9, %15 : vector<4x16x16xf32>
    %17 = vector.extract_strided_slice %10 {offsets = [0, 0, 2], sizes = [4, 16, 16], strides = [1, 1, 1]} : vector<4x16x20xf32> to vector<4x16x16xf32>
    %c1 = arith.constant 1 : index
    %c0_22 = arith.constant 0 : index
    %c0_23 = arith.constant 0 : index
    %c0_24 = arith.constant 0 : index
    %18 = vector.load %arg2[%c1, %c0_22, %c0_23, %c0_24] : memref<9x4x1x1xf32, #tpu.memory_space<vmem>>, vector<1x4x1x1xf32>
    %19 = vector.shape_cast %18 : vector<1x4x1x1xf32> to vector<4x1x1xf32>
    %20 = vector.broadcast %19 : vector<4x1x1xf32> to vector<4x16x16xf32>
    %21 = arith.mulf %17, %20 : vector<4x16x16xf32>
    %22 = arith.addf %16, %21 : vector<4x16x16xf32>
    %23 = vector.extract_strided_slice %10 {offsets = [0, 0, 4], sizes = [4, 16, 16], strides = [1, 1, 1]} : vector<4x16x20xf32> to vector<4x16x16xf32>
    %c2_25 = arith.constant 2 : index
    %c0_26 = arith.constant 0 : index
    %c0_27 = arith.constant 0 : index
    %c0_28 = arith.constant 0 : index
    %24 = vector.load %arg2[%c2_25, %c0_26, %c0_27, %c0_28] : memref<9x4x1x1xf32, #tpu.memory_space<vmem>>, vector<1x4x1x1xf32>
    %25 = vector.shape_cast %24 : vector<1x4x1x1xf32> to vector<4x1x1xf32>
    %26 = vector.broadcast %25 : vector<4x1x1xf32> to vector<4x16x16xf32>
    %27 = arith.mulf %23, %26 : vector<4x16x16xf32>
    %28 = arith.addf %22, %27 : vector<4x16x16xf32>
    %29 = vector.extract_strided_slice %8 {offsets = [0, 2, 0], sizes = [4, 16, 20], strides = [1, 1, 1]} : vector<4x20x20xf32> to vector<4x16x20xf32>
    %30 = vector.extract_strided_slice %29 {offsets = [0, 0, 0], sizes = [4, 16, 16], strides = [1, 1, 1]} : vector<4x16x20xf32> to vector<4x16x16xf32>
    %c3 = arith.constant 3 : index
    %c0_29 = arith.constant 0 : index
    %c0_30 = arith.constant 0 : index
    %c0_31 = arith.constant 0 : index
    %31 = vector.load %arg2[%c3, %c0_29, %c0_30, %c0_31] : memref<9x4x1x1xf32, #tpu.memory_space<vmem>>, vector<1x4x1x1xf32>
    %32 = vector.shape_cast %31 : vector<1x4x1x1xf32> to vector<4x1x1xf32>
    %33 = vector.broadcast %32 : vector<4x1x1xf32> to vector<4x16x16xf32>
    %34 = arith.mulf %30, %33 : vector<4x16x16xf32>
    %35 = arith.addf %28, %34 : vector<4x16x16xf32>
    %36 = vector.extract_strided_slice %29 {offsets = [0, 0, 2], sizes = [4, 16, 16], strides = [1, 1, 1]} : vector<4x16x20xf32> to vector<4x16x16xf32>
    %c4 = arith.constant 4 : index
    %c0_32 = arith.constant 0 : index
    %c0_33 = arith.constant 0 : index
    %c0_34 = arith.constant 0 : index
    %37 = vector.load %arg2[%c4, %c0_32, %c0_33, %c0_34] : memref<9x4x1x1xf32, #tpu.memory_space<vmem>>, vector<1x4x1x1xf32>
    %38 = vector.shape_cast %37 : vector<1x4x1x1xf32> to vector<4x1x1xf32>
    %39 = vector.broadcast %38 : vector<4x1x1xf32> to vector<4x16x16xf32>
    %40 = arith.mulf %36, %39 : vector<4x16x16xf32>
    %41 = arith.addf %35, %40 : vector<4x16x16xf32>
    %42 = vector.extract_strided_slice %29 {offsets = [0, 0, 4], sizes = [4, 16, 16], strides = [1, 1, 1]} : vector<4x16x20xf32> to vector<4x16x16xf32>
    %c5 = arith.constant 5 : index
    %c0_35 = arith.constant 0 : index
    %c0_36 = arith.constant 0 : index
    %c0_37 = arith.constant 0 : index
    %43 = vector.load %arg2[%c5, %c0_35, %c0_36, %c0_37] : memref<9x4x1x1xf32, #tpu.memory_space<vmem>>, vector<1x4x1x1xf32>
    %44 = vector.shape_cast %43 : vector<1x4x1x1xf32> to vector<4x1x1xf32>
    %45 = vector.broadcast %44 : vector<4x1x1xf32> to vector<4x16x16xf32>
    %46 = arith.mulf %42, %45 : vector<4x16x16xf32>
    %47 = arith.addf %41, %46 : vector<4x16x16xf32>
    %48 = vector.extract_strided_slice %8 {offsets = [0, 4, 0], sizes = [4, 16, 20], strides = [1, 1, 1]} : vector<4x20x20xf32> to vector<4x16x20xf32>
    %49 = vector.extract_strided_slice %48 {offsets = [0, 0, 0], sizes = [4, 16, 16], strides = [1, 1, 1]} : vector<4x16x20xf32> to vector<4x16x16xf32>
    %c6 = arith.constant 6 : index
    %c0_38 = arith.constant 0 : index
    %c0_39 = arith.constant 0 : index
    %c0_40 = arith.constant 0 : index
    %50 = vector.load %arg2[%c6, %c0_38, %c0_39, %c0_40] : memref<9x4x1x1xf32, #tpu.memory_space<vmem>>, vector<1x4x1x1xf32>
    %51 = vector.shape_cast %50 : vector<1x4x1x1xf32> to vector<4x1x1xf32>
    %52 = vector.broadcast %51 : vector<4x1x1xf32> to vector<4x16x16xf32>
    %53 = arith.mulf %49, %52 : vector<4x16x16xf32>
    %54 = arith.addf %47, %53 : vector<4x16x16xf32>
    %55 = vector.extract_strided_slice %48 {offsets = [0, 0, 2], sizes = [4, 16, 16], strides = [1, 1, 1]} : vector<4x16x20xf32> to vector<4x16x16xf32>
    %c7 = arith.constant 7 : index
    %c0_41 = arith.constant 0 : index
    %c0_42 = arith.constant 0 : index
    %c0_43 = arith.constant 0 : index
    %56 = vector.load %arg2[%c7, %c0_41, %c0_42, %c0_43] : memref<9x4x1x1xf32, #tpu.memory_space<vmem>>, vector<1x4x1x1xf32>
    %57 = vector.shape_cast %56 : vector<1x4x1x1xf32> to vector<4x1x1xf32>
    %58 = vector.broadcast %57 : vector<4x1x1xf32> to vector<4x16x16xf32>
    %59 = arith.mulf %55, %58 : vector<4x16x16xf32>
    %60 = arith.addf %54, %59 : vector<4x16x16xf32>
    %61 = vector.extract_strided_slice %48 {offsets = [0, 0, 4], sizes = [4, 16, 16], strides = [1, 1, 1]} : vector<4x16x20xf32> to vector<4x16x16xf32>
    %c8 = arith.constant 8 : index
    %c0_44 = arith.constant 0 : index
    %c0_45 = arith.constant 0 : index
    %c0_46 = arith.constant 0 : index
    %62 = vector.load %arg2[%c8, %c0_44, %c0_45, %c0_46] : memref<9x4x1x1xf32, #tpu.memory_space<vmem>>, vector<1x4x1x1xf32>
    %63 = vector.shape_cast %62 : vector<1x4x1x1xf32> to vector<4x1x1xf32>
    %64 = vector.broadcast %63 : vector<4x1x1xf32> to vector<4x16x16xf32>
    %65 = arith.mulf %61, %64 : vector<4x16x16xf32>
    %66 = arith.addf %60, %65 : vector<4x16x16xf32>
    %67 = vector.extract_strided_slice %66 {offsets = [0, 0, 0], sizes = [4, 1, 16], strides = [1, 1, 1]} : vector<4x16x16xf32> to vector<4x1x16xf32>
    %68 = vector.shape_cast %67 : vector<4x1x16xf32> to vector<4x16xf32>
    %c0_47 = arith.constant 0 : index
    %c0_48 = arith.constant 0 : index
    %69 = vector.load %arg8[%c0_47, %c0_48] : memref<4x256xf32, #tpu.memory_space<vmem>>, vector<4x16xf32>
    tpu.vector_store %arg8[%c0_47, %c0_48], %68 {strides = array<i32>} : memref<4x256xf32, #tpu.memory_space<vmem>>, vector<4x16xf32>,
    %70 = vector.extract_strided_slice %66 {offsets = [0, 1, 0], sizes = [4, 1, 16], strides = [1, 1, 1]} : vector<4x16x16xf32> to vector<4x1x16xf32>
    %71 = vector.shape_cast %70 : vector<4x1x16xf32> to vector<4x16xf32>
    %c0_49 = arith.constant 0 : index
    %c16 = arith.constant 16 : index
    %72 = vector.load %arg8[%c0_49, %c16] : memref<4x256xf32, #tpu.memory_space<vmem>>, vector<4x16xf32>
    tpu.vector_store %arg8[%c0_49, %c16], %71 {strides = array<i32>} : memref<4x256xf32, #tpu.memory_space<vmem>>, vector<4x16xf32>,
    %73 = vector.extract_strided_slice %66 {offsets = [0, 2, 0], sizes = [4, 1, 16], strides = [1, 1, 1]} : vector<4x16x16xf32> to vector<4x1x16xf32>
    %74 = vector.shape_cast %73 : vector<4x1x16xf32> to vector<4x16xf32>
    %c0_50 = arith.constant 0 : index
    %c32 = arith.constant 32 : index
    %75 = vector.load %arg8[%c0_50, %c32] : memref<4x256xf32, #tpu.memory_space<vmem>>, vector<4x16xf32>
    tpu.vector_store %arg8[%c0_50, %c32], %74 {strides = array<i32>} : memref<4x256xf32, #tpu.memory_space<vmem>>, vector<4x16xf32>,
    %76 = vector.extract_strided_slice %66 {offsets = [0, 3, 0], sizes = [4, 1, 16], strides = [1, 1, 1]} : vector<4x16x16xf32> to vector<4x1x16xf32>
    %77 = vector.shape_cast %76 : vector<4x1x16xf32> to vector<4x16xf32>
    %c0_51 = arith.constant 0 : index
    %c48 = arith.constant 48 : index
    %78 = vector.load %arg8[%c0_51, %c48] : memref<4x256xf32, #tpu.memory_space<vmem>>, vector<4x16xf32>
    tpu.vector_store %arg8[%c0_51, %c48], %77 {strides = array<i32>} : memref<4x256xf32, #tpu.memory_space<vmem>>, vector<4x16xf32>,
    %79 = vector.extract_strided_slice %66 {offsets = [0, 4, 0], sizes = [4, 1, 16], strides = [1, 1, 1]} : vector<4x16x16xf32> to vector<4x1x16xf32>
    %80 = vector.shape_cast %79 : vector<4x1x16xf32> to vector<4x16xf32>
    %c0_52 = arith.constant 0 : index
    %c64 = arith.constant 64 : index
    %81 = vector.load %arg8[%c0_52, %c64] : memref<4x256xf32, #tpu.memory_space<vmem>>, vector<4x16xf32>
    tpu.vector_store %arg8[%c0_52, %c64], %80 {strides = array<i32>} : memref<4x256xf32, #tpu.memory_space<vmem>>, vector<4x16xf32>,
    %82 = vector.extract_strided_slice %66 {offsets = [0, 5, 0], sizes = [4, 1, 16], strides = [1, 1, 1]} : vector<4x16x16xf32> to vector<4x1x16xf32>
    %83 = vector.shape_cast %82 : vector<4x1x16xf32> to vector<4x16xf32>
    %c0_53 = arith.constant 0 : index
    %c80 = arith.constant 80 : index
    %84 = vector.load %arg8[%c0_53, %c80] : memref<4x256xf32, #tpu.memory_space<vmem>>, vector<4x16xf32>
    tpu.vector_store %arg8[%c0_53, %c80], %83 {strides = array<i32>} : memref<4x256xf32, #tpu.memory_space<vmem>>, vector<4x16xf32>,
    %85 = vector.extract_strided_slice %66 {offsets = [0, 6, 0], sizes = [4, 1, 16], strides = [1, 1, 1]} : vector<4x16x16xf32> to vector<4x1x16xf32>
    %86 = vector.shape_cast %85 : vector<4x1x16xf32> to vector<4x16xf32>
    %c0_54 = arith.constant 0 : index
    %c96 = arith.constant 96 : index
    %87 = vector.load %arg8[%c0_54, %c96] : memref<4x256xf32, #tpu.memory_space<vmem>>, vector<4x16xf32>
    tpu.vector_store %arg8[%c0_54, %c96], %86 {strides = array<i32>} : memref<4x256xf32, #tpu.memory_space<vmem>>, vector<4x16xf32>,
    %88 = vector.extract_strided_slice %66 {offsets = [0, 7, 0], sizes = [4, 1, 16], strides = [1, 1, 1]} : vector<4x16x16xf32> to vector<4x1x16xf32>
    %89 = vector.shape_cast %88 : vector<4x1x16xf32> to vector<4x16xf32>
    %c0_55 = arith.constant 0 : index
    %c112 = arith.constant 112 : index
    %90 = vector.load %arg8[%c0_55, %c112] : memref<4x256xf32, #tpu.memory_space<vmem>>, vector<4x16xf32>
    tpu.vector_store %arg8[%c0_55, %c112], %89 {strides = array<i32>} : memref<4x256xf32, #tpu.memory_space<vmem>>, vector<4x16xf32>,
    %91 = vector.extract_strided_slice %66 {offsets = [0, 8, 0], sizes = [4, 1, 16], strides = [1, 1, 1]} : vector<4x16x16xf32> to vector<4x1x16xf32>
    %92 = vector.shape_cast %91 : vector<4x1x16xf32> to vector<4x16xf32>
    %c0_56 = arith.constant 0 : index
    %c128 = arith.constant 128 : index
    %93 = vector.load %arg8[%c0_56, %c128] : memref<4x256xf32, #tpu.memory_space<vmem>>, vector<4x16xf32>
    tpu.vector_store %arg8[%c0_56, %c128], %92 {strides = array<i32>} : memref<4x256xf32, #tpu.memory_space<vmem>>, vector<4x16xf32>,
    %94 = vector.extract_strided_slice %66 {offsets = [0, 9, 0], sizes = [4, 1, 16], strides = [1, 1, 1]} : vector<4x16x16xf32> to vector<4x1x16xf32>
    %95 = vector.shape_cast %94 : vector<4x1x16xf32> to vector<4x16xf32>
    %c0_57 = arith.constant 0 : index
    %c144 = arith.constant 144 : index
    %96 = vector.load %arg8[%c0_57, %c144] : memref<4x256xf32, #tpu.memory_space<vmem>>, vector<4x16xf32>
    tpu.vector_store %arg8[%c0_57, %c144], %95 {strides = array<i32>} : memref<4x256xf32, #tpu.memory_space<vmem>>, vector<4x16xf32>,
    %97 = vector.extract_strided_slice %66 {offsets = [0, 10, 0], sizes = [4, 1, 16], strides = [1, 1, 1]} : vector<4x16x16xf32> to vector<4x1x16xf32>
    %98 = vector.shape_cast %97 : vector<4x1x16xf32> to vector<4x16xf32>
    %c0_58 = arith.constant 0 : index
    %c160 = arith.constant 160 : index
    %99 = vector.load %arg8[%c0_58, %c160] : memref<4x256xf32, #tpu.memory_space<vmem>>, vector<4x16xf32>
    tpu.vector_store %arg8[%c0_58, %c160], %98 {strides = array<i32>} : memref<4x256xf32, #tpu.memory_space<vmem>>, vector<4x16xf32>,
    %100 = vector.extract_strided_slice %66 {offsets = [0, 11, 0], sizes = [4, 1, 16], strides = [1, 1, 1]} : vector<4x16x16xf32> to vector<4x1x16xf32>
    %101 = vector.shape_cast %100 : vector<4x1x16xf32> to vector<4x16xf32>
    %c0_59 = arith.constant 0 : index
    %c176 = arith.constant 176 : index
    %102 = vector.load %arg8[%c0_59, %c176] : memref<4x256xf32, #tpu.memory_space<vmem>>, vector<4x16xf32>
    tpu.vector_store %arg8[%c0_59, %c176], %101 {strides = array<i32>} : memref<4x256xf32, #tpu.memory_space<vmem>>, vector<4x16xf32>,
    %103 = vector.extract_strided_slice %66 {offsets = [0, 12, 0], sizes = [4, 1, 16], strides = [1, 1, 1]} : vector<4x16x16xf32> to vector<4x1x16xf32>
    %104 = vector.shape_cast %103 : vector<4x1x16xf32> to vector<4x16xf32>
    %c0_60 = arith.constant 0 : index
    %c192 = arith.constant 192 : index
    %105 = vector.load %arg8[%c0_60, %c192] : memref<4x256xf32, #tpu.memory_space<vmem>>, vector<4x16xf32>
    tpu.vector_store %arg8[%c0_60, %c192], %104 {strides = array<i32>} : memref<4x256xf32, #tpu.memory_space<vmem>>, vector<4x16xf32>,
    %106 = vector.extract_strided_slice %66 {offsets = [0, 13, 0], sizes = [4, 1, 16], strides = [1, 1, 1]} : vector<4x16x16xf32> to vector<4x1x16xf32>
    %107 = vector.shape_cast %106 : vector<4x1x16xf32> to vector<4x16xf32>
    %c0_61 = arith.constant 0 : index
    %c208 = arith.constant 208 : index
    %108 = vector.load %arg8[%c0_61, %c208] : memref<4x256xf32, #tpu.memory_space<vmem>>, vector<4x16xf32>
    tpu.vector_store %arg8[%c0_61, %c208], %107 {strides = array<i32>} : memref<4x256xf32, #tpu.memory_space<vmem>>, vector<4x16xf32>,
    %109 = vector.extract_strided_slice %66 {offsets = [0, 14, 0], sizes = [4, 1, 16], strides = [1, 1, 1]} : vector<4x16x16xf32> to vector<4x1x16xf32>
    %110 = vector.shape_cast %109 : vector<4x1x16xf32> to vector<4x16xf32>
    %c0_62 = arith.constant 0 : index
    %c224 = arith.constant 224 : index
    %111 = vector.load %arg8[%c0_62, %c224] : memref<4x256xf32, #tpu.memory_space<vmem>>, vector<4x16xf32>
    tpu.vector_store %arg8[%c0_62, %c224], %110 {strides = array<i32>} : memref<4x256xf32, #tpu.memory_space<vmem>>, vector<4x16xf32>,
    %112 = vector.extract_strided_slice %66 {offsets = [0, 15, 0], sizes = [4, 1, 16], strides = [1, 1, 1]} : vector<4x16x16xf32> to vector<4x1x16xf32>
    %113 = vector.shape_cast %112 : vector<4x1x16xf32> to vector<4x16xf32>
    %c0_63 = arith.constant 0 : index
    %c240 = arith.constant 240 : index
    %114 = vector.load %arg8[%c0_63, %c240] : memref<4x256xf32, #tpu.memory_space<vmem>>, vector<4x16xf32>
    tpu.vector_store %arg8[%c0_63, %c240], %113 {strides = array<i32>} : memref<4x256xf32, #tpu.memory_space<vmem>>, vector<4x16xf32>,
    %c0_64 = arith.constant 0 : index
    %c0_65 = arith.constant 0 : index
    %115 = vector.load %arg8[%c0_64, %c0_65] : memref<4x256xf32, #tpu.memory_space<vmem>>, vector<4x256xf32>
    %cst_66 = arith.constant dense<0.000000e+00> : vector<8x256xf32>
    %116 = tpu.matmul %0, %115, %cst_66 {dimension_numbers = #tpu.dot_dimension_numbers<[1], [0], [0], [1], [0, 0, 1, 1], [], []>} : vector<8x4xf32>, vector<4x256xf32>, vector<8x256xf32> -> vector<8x256xf32>
    %117 = vector.broadcast %1 : vector<8x1xf32> to vector<8x256xf32>
    %118 = arith.mulf %116, %117 : vector<8x256xf32>
    %119 = vector.broadcast %2 : vector<8x1xf32> to vector<8x256xf32>
    %120 = arith.addf %118, %119 : vector<8x256xf32>
    %cst_67 = arith.constant 0.000000e+00 : f32
    %121 = vector.broadcast %cst_67 : f32 to vector<8x256xf32>
    %122 = arith.maximumf %120, %121 : vector<8x256xf32>
    %c0_68 = arith.constant 0 : index
    %c0_69 = arith.constant 0 : index
    %c0_70 = arith.constant 0 : index
    %123 = vector.load %arg6[%c0_68, %c0_69, %c0_70] : memref<1x8x256xf32, #tpu.memory_space<vmem>>, vector<1x8x256xf32>
    %124 = vector.shape_cast %123 : vector<1x8x256xf32> to vector<8x256xf32>
    %125 = vector.shape_cast %122 : vector<8x256xf32> to vector<1x8x256xf32>
    tpu.vector_store %arg6[%c0_68, %c0_69, %c0_70], %125 {strides = array<i32>} : memref<1x8x256xf32, #tpu.memory_space<vmem>>, vector<1x8x256xf32>,
    return
  }
  func.func @transform_0(%arg0: i32) -> (i32, i32, i32, i32) {
    %c0_i32 = arith.constant 0 : i32
    %c0_i32_0 = arith.constant 0 : i32
    %c0_i32_1 = arith.constant 0 : i32
    %c0_i32_2 = arith.constant 0 : i32
    return %arg0, %c0_i32, %c0_i32_0, %c0_i32_1 : i32, i32, i32, i32
  }
  func.func @transform_1(%arg0: i32) -> (i32, i32, i32, i32) {
    %c0_i32 = arith.constant 0 : i32
    %c0_i32_0 = arith.constant 0 : i32
    %c0_i32_1 = arith.constant 0 : i32
    %c0_i32_2 = arith.constant 0 : i32
    %c0_i32_3 = arith.constant 0 : i32
    return %c0_i32, %c0_i32_0, %c0_i32_1, %c0_i32_2 : i32, i32, i32, i32
  }
  func.func @transform_2(%arg0: i32) -> (i32, i32) {
    %c0_i32 = arith.constant 0 : i32
    %c0_i32_0 = arith.constant 0 : i32
    %c0_i32_1 = arith.constant 0 : i32
    return %c0_i32, %c0_i32_0 : i32, i32
  }
  func.func @transform_3(%arg0: i32) -> (i32, i32) {
    %c0_i32 = arith.constant 0 : i32
    %c0_i32_0 = arith.constant 0 : i32
    %c0_i32_1 = arith.constant 0 : i32
    return %c0_i32, %c0_i32_0 : i32, i32
  }
  func.func @transform_4(%arg0: i32) -> (i32, i32) {
    %c0_i32 = arith.constant 0 : i32
    %c0_i32_0 = arith.constant 0 : i32
    %c0_i32_1 = arith.constant 0 : i32
    return %c0_i32, %c0_i32_0 : i32, i32
  }
  func.func @transform_5(%arg0: i32) -> (i32, i32, i32) {
    %c0_i32 = arith.constant 0 : i32
    %c0_i32_0 = arith.constant 0 : i32
    %c0_i32_1 = arith.constant 0 : i32
    return %arg0, %c0_i32, %c0_i32_0 : i32, i32, i32
  }
}

</mosaic_0001>

<llo_original>
// kernel: tpu_custom_call.1
$region0: #{tpu_custom_call.1}
  #allocation0 [shape = 'u32[]', space=smem, size = 0x4, offset = 0x4, fixed_abs, tag = 'smem constant byte address 0x4 - core index']
  #allocation1 [shape = 'u32[144,128]{1,0:T(1,128)}', space=vmem, size = 0x12000, scoped, tag = 'internal scratch']
  #allocation2 [shape = 'f32[4,20,20]{2,1,0:T(8,128)}', space=vmem, size = 0xc000, scoped, tag = 'scratch operand']
  #allocation3 [shape = 'f32[4,256]{1,0:T(4,128)}', space=vmem, size = 0x1000, scoped, tag = 'scratch operand']
  %s0 = inlined_call_operand.hbm [shape: f32[2,4,16,16], index: 0, kind: input, shape index: {}]
  %s1 = inlined_call_operand.vmem [shape: f32[9,4,1,1], index: 1, kind: input, shape index: {}]
  %s2 = inlined_call_operand.vmem [shape: f32[8,4], index: 2, kind: input, shape index: {}]
  %s3 = inlined_call_operand.vmem [shape: f32[8,1], index: 3, kind: input, shape index: {}]
  %s4 = inlined_call_operand.vmem [shape: f32[8,1], index: 4, kind: input, shape index: {}]
  %s5 = inlined_call_operand.hbm [shape: f32[2,8,256], index: 5, kind: output, shape index: {}]
  %s6 = sld [smem:[#allocation0]]
  $region57: #{tpu_custom_call.1} parent=0
    _
  %s8 = ssub.s32 1, %s6
  %s9 = scalar_select 0, %s8, %s6
  $region1: #{tpu_custom_call.1} parent=0
    #allocation4 [shape = 'u8[65536]{0}', space=vmem, size = 0x10000, scoped, tag = 'input window, operand 0']
    #allocation5 [shape = 's32[2]{0}', space=sflag, size = 0x8, scoped, tag = 'scoped memory for tpu_custom_call.1']
    #allocation6 [shape = 's32[2]{0}', space=sflag, size = 0x8, scoped, tag = 'scoped memory for tpu_custom_call.1']
    #allocation7 [shape = 'u8[16384]{0}', space=vmem, size = 0x4000, scoped, tag = 'output window, operand 0']
    %10 = vsyncpa [#allocation5], 0
    %s11 = scalar_lea.sflag [#allocation5], 1
    %12 = vsyncpa %s11, 0
    %13 = vsyncpa [#allocation6], 0
    %s14 = scalar_lea.sflag [#allocation6], 1
    %15 = vsyncpa %s14, 0
    loop: start=0, step=1, limit=4
    $region2: #{tpu_custom_call.1} parent=1 // loop_pre_header
      _
    $region3: #{tpu_custom_call.1} parent=1 // loop_header
      %s17 = sphi 0, %s21
      %p18 = scmp.ge.s32.totalorder %s17, 4
      %s27 = sphi 0, %s29
      %s30 = sphi 0, %s27
      %s31 = sphi 0, %s30
      %s47 = sphi 0, %s31
      %s51 = sphi 0, %s51
      %s53 = sphi 0, %s51
      %s54 = sphi 0, %s53
      %s68 = sphi 0, %s54
      %s72 = sphi 0, %s72
      %s74 = sphi 0, %s72
      %s75 = sphi 0, %s74
      %s89 = sphi 0, %s75
      %s93 = sphi 0, %s93
      %s95 = sphi 0, %s93
      %s96 = sphi 0, %s95
      %s110 = sphi 0, %s96
      %s114 = sphi 0, %s114
      %s116 = sphi 0, %s114
      %s117 = sphi 0, %s116
      %s131 = sphi 0, %s117
      %s137 = sphi 0, %s139
      %s140 = sphi 0, %s137
      %s141 = sphi 0, %s140
      %s157 = sphi 0, %s141
    $region4: #{tpu_custom_call.1} parent=1 // loop_header_branch
      %20 = sbr.rel (%p18) target = $region8
    $region5: #{tpu_custom_call.1} parent=1 // loop_body
      %s22 = ssub.s32 %s17, 1
      %s23 = ssub.s32 %s17, 2
      %s24 = sadd.s32 %s17, 1
      %s25 = ssub.s32 %s17, %s24
      %p26 = scmp.eq.s32.totalorder %s25, 0
      %s28 = sadd.s32 %s27, 1
      %s29 = scalar_select %p26, %s27, %s28
      %p32 = pneg %p26
      %p33 = scmp.eq.s32.totalorder %s17, 1
      %p34 = por %p32, %p33
      %p35 = scmp.ne.s32.totalorder %s27, %s30
      %p36 = scmp.eq.s32.totalorder %s17, 0
      %p37 = por %p35, %p36
      %p38 = scmp.ne.s32.totalorder %s27, %s30
      %p39 = scmp.eq.s32.totalorder %s22, 1
      %p40 = por %p38, %p39
      %p41 = scmp.ne.s32.totalorder %s30, %s31
      %p42 = scmp.eq.s32.totalorder %s22, 0
      %p43 = por %p41, %p42
      %p44 = scmp.ne.s32.totalorder %s30, %s31
      %p45 = scmp.eq.s32.totalorder %s23, 1
      %p46 = por %p44, %p45
      %p48 = scmp.ne.s32.totalorder %s31, %s47
      %p49 = scmp.eq.s32.totalorder %s23, 0
      %p50 = por %p48, %p49
      %s52 = sadd.s32 %s51, 1
      %p55 = scmp.eq.s32.totalorder %s17, 1
      %p56 = scmp.ne.s32.totalorder %s51, %s53
      %p57 = scmp.eq.s32.totalorder %s17, 0
      %p58 = por %p56, %p57
      %p59 = scmp.ne.s32.totalorder %s51, %s53
      %p60 = scmp.eq.s32.totalorder %s22, 1
      %p61 = por %p59, %p60
      %p62 = scmp.ne.s32.totalorder %s53, %s54
      %p63 = scmp.eq.s32.totalorder %s22, 0
      %p64 = por %p62, %p63
      %p65 = scmp.ne.s32.totalorder %s53, %s54
      %p66 = scmp.eq.s32.totalorder %s23, 1
      %p67 = por %p65, %p66
      %p69 = scmp.ne.s32.totalorder %s54, %s68
      %p70 = scmp.eq.s32.totalorder %s23, 0
      %p71 = por %p69, %p70
      %s73 = sadd.s32 %s72, 1
      %p76 = scmp.eq.s32.totalorder %s17, 1
      %p77 = scmp.ne.s32.totalorder %s72, %s74
      %p78 = scmp.eq.s32.totalorder %s17, 0
      %p79 = por %p77, %p78
      %p80 = scmp.ne.s32.totalorder %s72, %s74
      %p81 = scmp.eq.s32.totalorder %s22, 1
      %p82 = por %p80, %p81
      %p83 = scmp.ne.s32.totalorder %s74, %s75
      %p84 = scmp.eq.s32.totalorder %s22, 0
      %p85 = por %p83, %p84
      %p86 = scmp.ne.s32.totalorder %s74, %s75
      %p87 = scmp.eq.s32.totalorder %s23, 1
      %p88 = por %p86, %p87
      %p90 = scmp.ne.s32.totalorder %s75, %s89
      %p91 = scmp.eq.s32.totalorder %s23, 0
      %p92 = por %p90, %p91
      %s94 = sadd.s32 %s93, 1
      %p97 = scmp.eq.s32.totalorder %s17, 1
      %p98 = scmp.ne.s32.totalorder %s93, %s95
      %p99 = scmp.eq.s32.totalorder %s17, 0
      %p100 = por %p98, %p99
      %p101 = scmp.ne.s32.totalorder %s93, %s95
      %p102 = scmp.eq.s32.totalorder %s22, 1
      %p103 = por %p101, %p102
      %p104 = scmp.ne.s32.totalorder %s95, %s96
      %p105 = scmp.eq.s32.totalorder %s22, 0
      %p106 = por %p104, %p105
      %p107 = scmp.ne.s32.totalorder %s95, %s96
      %p108 = scmp.eq.s32.totalorder %s23, 1
      %p109 = por %p107, %p108
      %p111 = scmp.ne.s32.totalorder %s96, %s110
      %p112 = scmp.eq.s32.totalorder %s23, 0
      %p113 = por %p111, %p112
      %s115 = sadd.s32 %s114, 1
      %p118 = scmp.eq.s32.totalorder %s17, 1
      %p119 = scmp.ne.s32.totalorder %s114, %s116
      %p120 = scmp.eq.s32.totalorder %s17, 0
      %p121 = por %p119, %p120
      %p122 = scmp.ne.s32.totalorder %s114, %s116
      %p123 = scmp.eq.s32.totalorder %s22, 1
      %p124 = por %p122, %p123
      %p125 = scmp.ne.s32.totalorder %s116, %s117
      %p126 = scmp.eq.s32.totalorder %s22, 0
      %p127 = por %p125, %p126
      %p128 = scmp.ne.s32.totalorder %s116, %s117
      %p129 = scmp.eq.s32.totalorder %s23, 1
      %p130 = por %p128, %p129
      %p132 = scmp.ne.s32.totalorder %s117, %s131
      %p133 = scmp.eq.s32.totalorder %s23, 0
      %p134 = por %p132, %p133
      %s135 = ssub.s32 %s17, %s24
      %p136 = scmp.eq.s32.totalorder %s135, 0
      %s138 = sadd.s32 %s137, 1
      %s139 = scalar_select %p136, %s137, %s138
      %p142 = pneg %p136
      %p143 = scmp.eq.s32.totalorder %s17, 1
      %p144 = por %p142, %p143
      %p145 = scmp.ne.s32.totalorder %s137, %s140
      %p146 = scmp.eq.s32.totalorder %s17, 0
      %p147 = por %p145, %p146
      %p148 = scmp.ne.s32.totalorder %s137, %s140
      %p149 = scmp.eq.s32.totalorder %s22, 1
      %p150 = por %p148, %p149
      %p151 = scmp.ne.s32.totalorder %s140, %s141
      %p152 = scmp.eq.s32.totalorder %s22, 0
      %p153 = por %p151, %p152
      %p154 = scmp.ne.s32.totalorder %s140, %s141
      %p155 = scmp.eq.s32.totalorder %s23, 1
      %p156 = por %p154, %p155
      %p158 = scmp.ne.s32.totalorder %s141, %s157
      %p159 = scmp.eq.s32.totalorder %s23, 0
      %p160 = por %p158, %p159
      %p161 = scmp.le.s32.totalorder 1, %s17
      %p162 = scmp.lt.s32.totalorder %s17, 3
      %p163 = pnand %p161, %p162
      %p164 = pneg %p163
      // Predicated region
      $region9: #{tpu_custom_call.1} parent=5 // pred_check
        _
      $region10: #{tpu_custom_call.1} parent=5 // pred_check_branch
        %166 = sbr.rel (%p163) target = $region12
      $region11: #{tpu_custom_call.1} parent=5 // pred_region
        %s167 = ssub.s32 %s17, 1
        // Predicated region
        $region13: #{tpu_custom_call.1} parent=11 // pred_check
          %p168 = pneg %p64
        $region14: #{tpu_custom_call.1} parent=11 // pred_check_branch
          %170 = sbr.rel (%p168) target = $region16
        $region15: #{tpu_custom_call.1} parent=11 // pred_region
          _
        $region16: #{tpu_custom_call.1} parent=11 // pred_fallthru
          _
        // Predicated region
        $region17: #{tpu_custom_call.1} parent=11 // pred_check
          %p171 = pneg %p85
        $region18: #{tpu_custom_call.1} parent=11 // pred_check_branch
          %173 = sbr.rel (%p171) target = $region20
        $region19: #{tpu_custom_call.1} parent=11 // pred_region
          _
        $region20: #{tpu_custom_call.1} parent=11 // pred_fallthru
          _
        // Predicated region
        $region21: #{tpu_custom_call.1} parent=11 // pred_check
          %p174 = pneg %p106
        $region22: #{tpu_custom_call.1} parent=11 // pred_check_branch
          %176 = sbr.rel (%p174) target = $region24
        $region23: #{tpu_custom_call.1} parent=11 // pred_region
          _
        $region24: #{tpu_custom_call.1} parent=11 // pred_fallthru
          _
        // Predicated region
        $region25: #{tpu_custom_call.1} parent=11 // pred_check
          %p177 = pneg %p127
        $region26: #{tpu_custom_call.1} parent=11 // pred_check_branch
          %179 = sbr.rel (%p177) target = $region28
        $region27: #{tpu_custom_call.1} parent=11 // pred_region
          _
        $region28: #{tpu_custom_call.1} parent=11 // pred_fallthru
          _
      $region12: #{tpu_custom_call.1} parent=5 // pred_fallthru
        _
      %p180 = scmp.lt.s32.totalorder %s17, 2
      // Predicated region
      $region29: #{tpu_custom_call.1} parent=5 // pred_check
        %p181 = pneg %p180
      $region30: #{tpu_custom_call.1} parent=5 // pred_check_branch
        %183 = sbr.rel (%p181) target = $region32
      $region31: #{tpu_custom_call.1} parent=5 // pred_region
        // Predicated region
        $region33: #{tpu_custom_call.1} parent=31 // pred_check
          %p184 = pneg %p37
        $region34: #{tpu_custom_call.1} parent=31 // pred_check_branch
          %186 = sbr.rel (%p184) target = $region36
        $region35: #{tpu_custom_call.1} parent=31 // pred_region
          %s187 = sand.u32 %s27, 1
          %s188 = scalar_lea.sflag [#allocation5], %s187
          %s189 = sand.u32 %s27, 1
          %s190 = smul.addr %s189, 64
          %s191 = scalar_lea.vmem [#allocation4], %s190
          %s193 = ssub.s32 1024, 1024
          %194 = vsyncadd %s188, %s193
          %s195 = smul.addr %s17, 8
          %s196 = smul.addr %s195, 128
          %s197 = scalar_lea.hbm %s0, %s196
          %s198 = sshll.u32 %s191, 4
          %s199 = int_to_ptr.vmem [resolvable:$true] %s198
          %204 = dma.hbm_to_vmem [thread:$0]  %s197, 1024, %s199, %s188, 128, 128, 8
        $region36: #{tpu_custom_call.1} parent=31 // pred_fallthru
          _
      $region32: #{tpu_custom_call.1} parent=5 // pred_fallthru
        _
      %p205 = scmp.le.s32.totalorder 1, %s17
      %p206 = scmp.lt.s32.totalorder %s17, 3
      %p207 = pnand %p205, %p206
      %p208 = pneg %p207
      // Predicated region
      $region37: #{tpu_custom_call.1} parent=5 // pred_check
        _
      $region38: #{tpu_custom_call.1} parent=5 // pred_check_branch
        %210 = sbr.rel (%p207) target = $region40
      $region39: #{tpu_custom_call.1} parent=5 // pred_region
        %s211 = ssub.s32 %s17, 1
        %s212 = sand.u32 %s30, 1
        %s213 = scalar_lea.sflag [#allocation5], %s212
        %s214 = sand.u32 %s30, 1
        %s215 = smul.addr %s214, 64
        %s216 = scalar_lea.vmem [#allocation4], %s215
        // Predicated region
        $region41: #{tpu_custom_call.1} parent=39 // pred_check
          %p217 = pneg %p43
        $region42: #{tpu_custom_call.1} parent=39 // pred_check_branch
          %219 = sbr.rel (%p217) target = $region44
        $region43: #{tpu_custom_call.1} parent=39 // pred_region
          %220 = dma.done %s213, 1024
        $region44: #{tpu_custom_call.1} parent=39 // pred_fallthru
          _
        %s221 = sand.u32 %s30, 1
        %s222 = scalar_lea.sflag [#allocation5], %s221
        %s223 = sand.u32 %s30, 1
        %s224 = smul.addr %s223, 64
        %s225 = scalar_lea.vmem [#allocation4], %s224
        %p226 = pneg %p43
        %p227 = pneg %p40
        %p228 = pneg %p64
        %p229 = pneg %p61
        %p230 = pneg %p85
        %p231 = pneg %p82
        %p232 = pneg %p106
        %p233 = pneg %p103
        %p234 = pneg %p127
        %p235 = pneg %p124
        %p236 = pneg %p153
        %p237 = pneg %p150
        %s238 = sand.u32 %s140, 1
        %s239 = scalar_lea.sflag [#allocation6], %s238
        %s240 = sand.u32 %s140, 1
        %s241 = smul.addr %s240, 16
        %s242 = scalar_lea.vmem [#allocation7], %s241
        %v243 = vld [vmem:[%s2] sm:$0xff]
        %v244 = vld [vmem:[%s3] sm:$0xff]
        %v245 = vld [vmem:[%s4] sm:$0xff]
        %vm246 = vcmask 162816
        %247 = vst.msk [vmem:[#allocation2] sm:$0xff] %vm246, 0.0
        %248 = vst.msk [vmem:[#allocation2 + $0x8] sm:$0xff] %vm246, 0.0
        %vm249 = vcmask 158720
        %250 = vst.msk [vmem:[#allocation2 + $0x10] sm:$0xf] %vm249, 0.0
        %251 = vst.msk [vmem:[#allocation2 + $0x18] sm:$0xff] %vm246, 0.0
        %252 = vst.msk [vmem:[#allocation2 + $0x20] sm:$0xff] %vm246, 0.0
        %253 = vst.msk [vmem:[#allocation2 + $0x28] sm:$0xf] %vm249, 0.0
        %254 = vst.msk [vmem:[#allocation2 + $0x30] sm:$0xff] %vm246, 0.0
        %255 = vst.msk [vmem:[#allocation2 + $0x38] sm:$0xff] %vm246, 0.0
        %256 = vst.msk [vmem:[#allocation2 + $0x40] sm:$0xf] %vm249, 0.0
        %257 = vst.msk [vmem:[#allocation2 + $0x48] sm:$0xff] %vm246, 0.0
        %258 = vst.msk [vmem:[#allocation2 + $0x50] sm:$0xff] %vm246, 0.0
        %259 = vst.msk [vmem:[#allocation2 + $0x58] sm:$0xf] %vm249, 0.0
        %v260 = vld [vmem:[%s216] sm:$0xff]
        %v261 = vld [vmem:[%s216 + $0x8] sm:$0xff]
        %v262 = vld [vmem:[%s216 + $0x10] sm:$0xff]
        %v263 = vld [vmem:[%s216 + $0x18] sm:$0xff]
        %v264 = vld [vmem:[%s216 + $0x20] sm:$0xff]
        %v265 = vld [vmem:[%s216 + $0x28] sm:$0xff]
        %v266 = vld [vmem:[%s216 + $0x30] sm:$0xff]
        %v267 = vld [vmem:[%s216 + $0x38] sm:$0xff]
        %276 = vrot.lane.b32.xlu0 %v260, 2
        %v277 = vpop.permute.xlu0 %276
        %278 = vrot.lane.b32.xlu0 %v261, 2
        %v279 = vpop.permute.xlu0 %278
        %280 = vrot.lane.b32.xlu0 %v262, 2
        %v281 = vpop.permute.xlu0 %280
        %282 = vrot.lane.b32.xlu0 %v263, 2
        %v283 = vpop.permute.xlu0 %282
        %284 = vrot.lane.b32.xlu0 %v264, 2
        %v285 = vpop.permute.xlu0 %284
        %286 = vrot.lane.b32.xlu0 %v265, 2
        %v287 = vpop.permute.xlu0 %286
        %288 = vrot.lane.b32.xlu0 %v266, 2
        %v289 = vpop.permute.xlu0 %288
        %290 = vrot.lane.b32.xlu0 %v267, 2
        %v291 = vpop.permute.xlu0 %290
        %vm300 = vcmask 146448
        %301 = vst.msk [vmem:[#allocation2 + $0x2] sm:$0xff] %vm300, %v277
        %302 = vst.msk [vmem:[#allocation2 + $0xa] sm:$0xff] %vm300, %v279
        %303 = vst.msk [vmem:[#allocation2 + $0x1a] sm:$0xff] %vm300, %v281
        %304 = vst.msk [vmem:[#allocation2 + $0x22] sm:$0xff] %vm300, %v283
        %305 = vst.msk [vmem:[#allocation2 + $0x32] sm:$0xff] %vm300, %v285
        %306 = vst.msk [vmem:[#allocation2 + $0x3a] sm:$0xff] %vm300, %v287
        %307 = vst.msk [vmem:[#allocation2 + $0x4a] sm:$0xff] %vm300, %v289
        %308 = vst.msk [vmem:[#allocation2 + $0x52] sm:$0xff] %vm300, %v291
        %v309 = vld [vmem:[#allocation2] sm:$0xff]
        %v310 = vld [vmem:[#allocation2 + $0x8] sm:$0xff]
        %v311 = vld [vmem:[#allocation2 + $0x10] sm:$0xf]
        %v312 = vld [vmem:[#allocation2 + $0x18] sm:$0xff]
        %v313 = vld [vmem:[#allocation2 + $0x20] sm:$0xff]
        %v314 = vld [vmem:[#allocation2 + $0x28] sm:$0xf]
        %v315 = vld [vmem:[#allocation2 + $0x30] sm:$0xff]
        %v316 = vld [vmem:[#allocation2 + $0x38] sm:$0xff]
        %v317 = vld [vmem:[#allocation2 + $0x40] sm:$0xf]
        %v318 = vld [vmem:[#allocation2 + $0x48] sm:$0xff]
        %v319 = vld [vmem:[#allocation2 + $0x50] sm:$0xff]
        %v320 = vld [vmem:[#allocation2 + $0x58] sm:$0xf]
        %v321 = vld [vmem:[%s1] sm:$0x1]
        %v322 = vld [vmem:[%s1 + $0x1] sm:$0x1]
        %v323 = vld [vmem:[%s1 + $0x2] sm:$0x1]
        %v324 = vld [vmem:[%s1 + $0x3] sm:$0x1]
        %v329 = vlaneseq
        %v330 = vshrl.u32 %v329, 7
        %v331 = vsub.s32 0, %v330
        %v332 = vrot.slane %v321, %v331
        %v333 = vlaneseq
        %v334 = vshrl.u32 %v333, 7
        %v335 = vsub.s32 0, %v334
        %v336 = vrot.slane %v322, %v335
        %v337 = vlaneseq
        %v338 = vshrl.u32 %v337, 7
        %v339 = vsub.s32 0, %v338
        %v340 = vrot.slane %v323, %v339
        %v341 = vlaneseq
        %v342 = vshrl.u32 %v341, 7
        %v343 = vsub.s32 0, %v342
        %v344 = vrot.slane %v324, %v343
        %345 = vset.pattern.permute.xlu0 0
        %346 = vperm.xlu0 %345, %v332
        %v347 = vpop.permute.xlu0 %346
        %349 = vset.pattern.permute.xlu0 0
        %350 = vperm.xlu0 %349, %v336
        %v351 = vpop.permute.xlu0 %350
        %353 = vset.pattern.permute.xlu0 0
        %354 = vperm.xlu0 %353, %v340
        %v355 = vpop.permute.xlu0 %354
        %357 = vset.pattern.permute.xlu0 0
        %358 = vperm.xlu0 %357, %v344
        %v359 = vpop.permute.xlu0 %358
        %v361 = vmul.f32 %v309, %v347
        %v362 = vmul.f32 %v310, %v347
        %v363 = vmul.f32 %v312, %v351
        %v364 = vmul.f32 %v313, %v351
        %v365 = vmul.f32 %v315, %v355
        %v366 = vmul.f32 %v316, %v355
        %v367 = vmul.f32 %v318, %v359
        %v368 = vmul.f32 %v319, %v359
        %v369 = vadd.f32 %v361, 0.0
        %v370 = vadd.f32 %v362, 0.0
        %v371 = vadd.f32 %v363, 0.0
        %v372 = vadd.f32 %v364, 0.0
        %v373 = vadd.f32 %v365, 0.0
        %v374 = vadd.f32 %v366, 0.0
        %v375 = vadd.f32 %v367, 0.0
        %v376 = vadd.f32 %v368, 0.0
        %s377 = scalar_lea.vmem %s1, 4
        %v378 = vld [vmem:[%s377] sm:$0x1]
        %v379 = vld [vmem:[%s377 + $0x1] sm:$0x1]
        %v380 = vld [vmem:[%s377 + $0x2] sm:$0x1]
        %v381 = vld [vmem:[%s377 + $0x3] sm:$0x1]
        %v386 = vlaneseq
        %v387 = vshrl.u32 %v386, 7
        %v388 = vsub.s32 0, %v387
        %v389 = vrot.slane %v378, %v388
        %v390 = vlaneseq
        %v391 = vshrl.u32 %v390, 7
        %v392 = vsub.s32 0, %v391
        %v393 = vrot.slane %v379, %v392
        %v394 = vlaneseq
        %v395 = vshrl.u32 %v394, 7
        %v396 = vsub.s32 0, %v395
        %v397 = vrot.slane %v380, %v396
        %v398 = vlaneseq
        %v399 = vshrl.u32 %v398, 7
        %v400 = vsub.s32 0, %v399
        %v401 = vrot.slane %v381, %v400
        %402 = vset.pattern.permute.xlu0 0
        %403 = vperm.xlu0 %402, %v389
        %v404 = vpop.permute.xlu0 %403
        %406 = vset.pattern.permute.xlu0 0
        %407 = vperm.xlu0 %406, %v393
        %v408 = vpop.permute.xlu0 %407
        %410 = vset.pattern.permute.xlu0 0
        %411 = vperm.xlu0 %410, %v397
        %v412 = vpop.permute.xlu0 %411
        %414 = vset.pattern.permute.xlu0 0
        %415 = vperm.xlu0 %414, %v401
        %v416 = vpop.permute.xlu0 %415
        %v418 = vmul.f32 %v309, %v404
        %v419 = vmul.f32 %v310, %v404
        %v420 = vmul.f32 %v312, %v408
        %v421 = vmul.f32 %v313, %v408
        %v422 = vmul.f32 %v315, %v412
        %v423 = vmul.f32 %v316, %v412
        %v424 = vmul.f32 %v318, %v416
        %v425 = vmul.f32 %v319, %v416
        %434 = vrot.lane.b32.xlu0 %v418, 126
        %v435 = vpop.permute.xlu0 %434
        %436 = vrot.lane.b32.xlu0 %v419, 126
        %v437 = vpop.permute.xlu0 %436
        %438 = vrot.lane.b32.xlu0 %v420, 126
        %v439 = vpop.permute.xlu0 %438
        %440 = vrot.lane.b32.xlu0 %v421, 126
        %v441 = vpop.permute.xlu0 %440
        %442 = vrot.lane.b32.xlu0 %v422, 126
        %v443 = vpop.permute.xlu0 %442
        %444 = vrot.lane.b32.xlu0 %v423, 126
        %v445 = vpop.permute.xlu0 %444
        %446 = vrot.lane.b32.xlu0 %v424, 126
        %v447 = vpop.permute.xlu0 %446
        %448 = vrot.lane.b32.xlu0 %v425, 126
        %v449 = vpop.permute.xlu0 %448
        %v458 = vadd.f32 %v369, %v435
        %v459 = vadd.f32 %v370, %v437
        %v460 = vadd.f32 %v371, %v439
        %v461 = vadd.f32 %v372, %v441
        %v462 = vadd.f32 %v373, %v443
        %v463 = vadd.f32 %v374, %v445
        %v464 = vadd.f32 %v375, %v447
        %v465 = vadd.f32 %v376, %v449
        %s466 = scalar_lea.vmem %s1, 8
        %v467 = vld [vmem:[%s466] sm:$0x1]
        %v468 = vld [vmem:[%s466 + $0x1] sm:$0x1]
        %v469 = vld [vmem:[%s466 + $0x2] sm:$0x1]
        %v470 = vld [vmem:[%s466 + $0x3] sm:$0x1]
        %v475 = vlaneseq
        %v476 = vshrl.u32 %v475, 7
        %v477 = vsub.s32 0, %v476
        %v478 = vrot.slane %v467, %v477
        %v479 = vlaneseq
        %v480 = vshrl.u32 %v479, 7
        %v481 = vsub.s32 0, %v480
        %v482 = vrot.slane %v468, %v481
        %v483 = vlaneseq
        %v484 = vshrl.u32 %v483, 7
        %v485 = vsub.s32 0, %v484
        %v486 = vrot.slane %v469, %v485
        %v487 = vlaneseq
        %v488 = vshrl.u32 %v487, 7
        %v489 = vsub.s32 0, %v488
        %v490 = vrot.slane %v470, %v489
        %491 = vset.pattern.permute.xlu0 0
        %492 = vperm.xlu0 %491, %v478
        %v493 = vpop.permute.xlu0 %492
        %495 = vset.pattern.permute.xlu0 0
        %496 = vperm.xlu0 %495, %v482
        %v497 = vpop.permute.xlu0 %496
        %499 = vset.pattern.permute.xlu0 0
        %500 = vperm.xlu0 %499, %v486
        %v501 = vpop.permute.xlu0 %500
        %503 = vset.pattern.permute.xlu0 0
        %504 = vperm.xlu0 %503, %v490
        %v505 = vpop.permute.xlu0 %504
        %v507 = vmul.f32 %v309, %v493
        %v508 = vmul.f32 %v310, %v493
        %v509 = vmul.f32 %v312, %v497
        %v510 = vmul.f32 %v313, %v497
        %v511 = vmul.f32 %v315, %v501
        %v512 = vmul.f32 %v316, %v501
        %v513 = vmul.f32 %v318, %v505
        %v514 = vmul.f32 %v319, %v505
        %523 = vrot.lane.b32.xlu0 %v507, 124
        %v524 = vpop.permute.xlu0 %523
        %525 = vrot.lane.b32.xlu0 %v508, 124
        %v526 = vpop.permute.xlu0 %525
        %527 = vrot.lane.b32.xlu0 %v509, 124
        %v528 = vpop.permute.xlu0 %527
        %529 = vrot.lane.b32.xlu0 %v510, 124
        %v530 = vpop.permute.xlu0 %529
        %531 = vrot.lane.b32.xlu0 %v511, 124
        %v532 = vpop.permute.xlu0 %531
        %533 = vrot.lane.b32.xlu0 %v512, 124
        %v534 = vpop.permute.xlu0 %533
        %535 = vrot.lane.b32.xlu0 %v513, 124
        %v536 = vpop.permute.xlu0 %535
        %537 = vrot.lane.b32.xlu0 %v514, 124
        %v538 = vpop.permute.xlu0 %537
        %v547 = vadd.f32 %v458, %v524
        %v548 = vadd.f32 %v459, %v526
        %v549 = vadd.f32 %v460, %v528
        %v550 = vadd.f32 %v461, %v530
        %v551 = vadd.f32 %v462, %v532
        %v552 = vadd.f32 %v463, %v534
        %v553 = vadd.f32 %v464, %v536
        %v554 = vadd.f32 %v465, %v538
        %s555 = scalar_lea.vmem %s1, 12
        %v556 = vld [vmem:[%s555] sm:$0x1]
        %v557 = vld [vmem:[%s555 + $0x1] sm:$0x1]
        %v558 = vld [vmem:[%s555 + $0x2] sm:$0x1]
        %v559 = vld [vmem:[%s555 + $0x3] sm:$0x1]
        %v564 = vlaneseq
        %v565 = vshrl.u32 %v564, 7
        %v566 = vsub.s32 0, %v565
        %v567 = vrot.slane %v556, %v566
        %v568 = vlaneseq
        %v569 = vshrl.u32 %v568, 7
        %v570 = vsub.s32 0, %v569
        %v571 = vrot.slane %v557, %v570
        %v572 = vlaneseq
        %v573 = vshrl.u32 %v572, 7
        %v574 = vsub.s32 0, %v573
        %v575 = vrot.slane %v558, %v574
        %v576 = vlaneseq
        %v577 = vshrl.u32 %v576, 7
        %v578 = vsub.s32 0, %v577
        %v579 = vrot.slane %v559, %v578
        %580 = vset.pattern.permute.xlu0 0
        %581 = vperm.xlu0 %580, %v567
        %v582 = vpop.permute.xlu0 %581
        %584 = vset.pattern.permute.xlu0 0
        %585 = vperm.xlu0 %584, %v571
        %v586 = vpop.permute.xlu0 %585
        %588 = vset.pattern.permute.xlu0 0
        %589 = vperm.xlu0 %588, %v575
        %v590 = vpop.permute.xlu0 %589
        %592 = vset.pattern.permute.xlu0 0
        %593 = vperm.xlu0 %592, %v579
        %v594 = vpop.permute.xlu0 %593
        %v596 = vmul.f32 %v309, %v582
        %v597 = vmul.f32 %v310, %v582
        %v598 = vmul.f32 %v311, %v582
        %v599 = vmul.f32 %v312, %v586
        %v600 = vmul.f32 %v313, %v586
        %v601 = vmul.f32 %v314, %v586
        %v602 = vmul.f32 %v315, %v590
        %v603 = vmul.f32 %v316, %v590
        %v604 = vmul.f32 %v317, %v590
        %v605 = vmul.f32 %v318, %v594
        %v606 = vmul.f32 %v319, %v594
        %v607 = vmul.f32 %v320, %v594
        %vm620 = vcmask 1045504
        %v621 = vrot.slane %v596, 2
        %v622 = vrot.slane %v597, 2
        %v623 = vsel %vm620, %v621, %v622
        %v624 = vrot.slane %v598, 2
        %v625 = vsel %vm620, %v622, %v624
        %v626 = vrot.slane %v599, 2
        %v627 = vrot.slane %v600, 2
        %v628 = vsel %vm620, %v626, %v627
        %v629 = vrot.slane %v601, 2
        %v630 = vsel %vm620, %v627, %v629
        %v631 = vrot.slane %v602, 2
        %v632 = vrot.slane %v603, 2
        %v633 = vsel %vm620, %v631, %v632
        %v634 = vrot.slane %v604, 2
        %v635 = vsel %vm620, %v632, %v634
        %v636 = vrot.slane %v605, 2
        %v637 = vrot.slane %v606, 2
        %v638 = vsel %vm620, %v636, %v637
        %v639 = vrot.slane %v607, 2
        %v640 = vsel %vm620, %v637, %v639
        %v649 = vadd.f32 %v547, %v623
        %v650 = vadd.f32 %v548, %v625
        %v651 = vadd.f32 %v549, %v628
        %v652 = vadd.f32 %v550, %v630
        %v653 = vadd.f32 %v551, %v633
        %v654 = vadd.f32 %v552, %v635
        %v655 = vadd.f32 %v553, %v638
        %v656 = vadd.f32 %v554, %v640
        %s657 = scalar_lea.vmem %s1, 16
        %v658 = vld [vmem:[%s657] sm:$0x1]
        %v659 = vld [vmem:[%s657 + $0x1] sm:$0x1]
        %v660 = vld [vmem:[%s657 + $0x2] sm:$0x1]
        %v661 = vld [vmem:[%s657 + $0x3] sm:$0x1]
        %v666 = vlaneseq
        %v667 = vshrl.u32 %v666, 7
        %v668 = vsub.s32 0, %v667
        %v669 = vrot.slane %v658, %v668
        %v670 = vlaneseq
        %v671 = vshrl.u32 %v670, 7
        %v672 = vsub.s32 0, %v671
        %v673 = vrot.slane %v659, %v672
        %v674 = vlaneseq
        %v675 = vshrl.u32 %v674, 7
        %v676 = vsub.s32 0, %v675
        %v677 = vrot.slane %v660, %v676
        %v678 = vlaneseq
        %v679 = vshrl.u32 %v678, 7
        %v680 = vsub.s32 0, %v679
        %v681 = vrot.slane %v661, %v680
        %682 = vset.pattern.permute.xlu0 0
        %683 = vperm.xlu0 %682, %v669
        %v684 = vpop.permute.xlu0 %683
        %686 = vset.pattern.permute.xlu0 0
        %687 = vperm.xlu0 %686, %v673
        %v688 = vpop.permute.xlu0 %687
        %690 = vset.pattern.permute.xlu0 0
        %691 = vperm.xlu0 %690, %v677
        %v692 = vpop.permute.xlu0 %691
        %694 = vset.pattern.permute.xlu0 0
        %695 = vperm.xlu0 %694, %v681
        %v696 = vpop.permute.xlu0 %695
        %v698 = vmul.f32 %v309, %v684
        %v699 = vmul.f32 %v310, %v684
        %v700 = vmul.f32 %v311, %v684
        %v701 = vmul.f32 %v312, %v688
        %v702 = vmul.f32 %v313, %v688
        %v703 = vmul.f32 %v314, %v688
        %v704 = vmul.f32 %v315, %v692
        %v705 = vmul.f32 %v316, %v692
        %v706 = vmul.f32 %v317, %v692
        %v707 = vmul.f32 %v318, %v696
        %v708 = vmul.f32 %v319, %v696
        %v709 = vmul.f32 %v320, %v696
        %v722 = vrot.slane %v698, 2
        %v723 = vrot.slane %v699, 2
        %v724 = vsel %vm620, %v722, %v723
        %v725 = vrot.slane %v700, 2
        %v726 = vsel %vm620, %v723, %v725
        %v727 = vrot.slane %v701, 2
        %v728 = vrot.slane %v702, 2
        %v729 = vsel %vm620, %v727, %v728
        %v730 = vrot.slane %v703, 2
        %v731 = vsel %vm620, %v728, %v730
        %v732 = vrot.slane %v704, 2
        %v733 = vrot.slane %v705, 2
        %v734 = vsel %vm620, %v732, %v733
        %v735 = vrot.slane %v706, 2
        %v736 = vsel %vm620, %v733, %v735
        %v737 = vrot.slane %v707, 2
        %v738 = vrot.slane %v708, 2
        %v739 = vsel %vm620, %v737, %v738
        %v740 = vrot.slane %v709, 2
        %v741 = vsel %vm620, %v738, %v740
        %742 = vrot.lane.b32.xlu0 %v724, 126
        %v743 = vpop.permute.xlu0 %742
        %744 = vrot.lane.b32.xlu0 %v726, 126
        %v745 = vpop.permute.xlu0 %744
        %746 = vrot.lane.b32.xlu0 %v729, 126
        %v747 = vpop.permute.xlu0 %746
        %748 = vrot.lane.b32.xlu0 %v731, 126
        %v749 = vpop.permute.xlu0 %748
        %750 = vrot.lane.b32.xlu0 %v734, 126
        %v751 = vpop.permute.xlu0 %750
        %752 = vrot.lane.b32.xlu0 %v736, 126
        %v753 = vpop.permute.xlu0 %752
        %754 = vrot.lane.b32.xlu0 %v739, 126
        %v755 = vpop.permute.xlu0 %754
        %756 = vrot.lane.b32.xlu0 %v741, 126
        %v757 = vpop.permute.xlu0 %756
        %v766 = vadd.f32 %v649, %v743
        %v767 = vadd.f32 %v650, %v745
        %v768 = vadd.f32 %v651, %v747
        %v769 = vadd.f32 %v652, %v749
        %v770 = vadd.f32 %v653, %v751
        %v771 = vadd.f32 %v654, %v753
        %v772 = vadd.f32 %v655, %v755
        %v773 = vadd.f32 %v656, %v757
        %s774 = scalar_lea.vmem %s1, 20
        %v775 = vld [vmem:[%s774] sm:$0x1]
        %v776 = vld [vmem:[%s774 + $0x1] sm:$0x1]
        %v777 = vld [vmem:[%s774 + $0x2] sm:$0x1]
        %v778 = vld [vmem:[%s774 + $0x3] sm:$0x1]
        %v783 = vlaneseq
        %v784 = vshrl.u32 %v783, 7
        %v785 = vsub.s32 0, %v784
        %v786 = vrot.slane %v775, %v785
        %v787 = vlaneseq
        %v788 = vshrl.u32 %v787, 7
        %v789 = vsub.s32 0, %v788
        %v790 = vrot.slane %v776, %v789
        %v791 = vlaneseq
        %v792 = vshrl.u32 %v791, 7
        %v793 = vsub.s32 0, %v792
        %v794 = vrot.slane %v777, %v793
        %v795 = vlaneseq
        %v796 = vshrl.u32 %v795, 7
        %v797 = vsub.s32 0, %v796
        %v798 = vrot.slane %v778, %v797
        %799 = vset.pattern.permute.xlu0 0
        %800 = vperm.xlu0 %799, %v786
        %v801 = vpop.permute.xlu0 %800
        %803 = vset.pattern.permute.xlu0 0
        %804 = vperm.xlu0 %803, %v790
        %v805 = vpop.permute.xlu0 %804
        %807 = vset.pattern.permute.xlu0 0
        %808 = vperm.xlu0 %807, %v794
        %v809 = vpop.permute.xlu0 %808
        %811 = vset.pattern.permute.xlu0 0
        %812 = vperm.xlu0 %811, %v798
        %v813 = vpop.permute.xlu0 %812
        %v815 = vmul.f32 %v309, %v801
        %v816 = vmul.f32 %v310, %v801
        %v817 = vmul.f32 %v311, %v801
        %v818 = vmul.f32 %v312, %v805
        %v819 = vmul.f32 %v313, %v805
        %v820 = vmul.f32 %v314, %v805
        %v821 = vmul.f32 %v315, %v809
        %v822 = vmul.f32 %v316, %v809
        %v823 = vmul.f32 %v317, %v809
        %v824 = vmul.f32 %v318, %v813
        %v825 = vmul.f32 %v319, %v813
        %v826 = vmul.f32 %v320, %v813
        %v839 = vrot.slane %v815, 2
        %v840 = vrot.slane %v816, 2
        %v841 = vsel %vm620, %v839, %v840
        %v842 = vrot.slane %v817, 2
        %v843 = vsel %vm620, %v840, %v842
        %v844 = vrot.slane %v818, 2
        %v845 = vrot.slane %v819, 2
        %v846 = vsel %vm620, %v844, %v845
        %v847 = vrot.slane %v820, 2
        %v848 = vsel %vm620, %v845, %v847
        %v849 = vrot.slane %v821, 2
        %v850 = vrot.slane %v822, 2
        %v851 = vsel %vm620, %v849, %v850
        %v852 = vrot.slane %v823, 2
        %v853 = vsel %vm620, %v850, %v852
        %v854 = vrot.slane %v824, 2
        %v855 = vrot.slane %v825, 2
        %v856 = vsel %vm620, %v854, %v855
        %v857 = vrot.slane %v826, 2
        %v858 = vsel %vm620, %v855, %v857
        %859 = vrot.lane.b32.xlu0 %v841, 124
        %v860 = vpop.permute.xlu0 %859
        %861 = vrot.lane.b32.xlu0 %v843, 124
        %v862 = vpop.permute.xlu0 %861
        %863 = vrot.lane.b32.xlu0 %v846, 124
        %v864 = vpop.permute.xlu0 %863
        %865 = vrot.lane.b32.xlu0 %v848, 124
        %v866 = vpop.permute.xlu0 %865
        %867 = vrot.lane.b32.xlu0 %v851, 124
        %v868 = vpop.permute.xlu0 %867
        %869 = vrot.lane.b32.xlu0 %v853, 124
        %v870 = vpop.permute.xlu0 %869
        %871 = vrot.lane.b32.xlu0 %v856, 124
        %v872 = vpop.permute.xlu0 %871
        %873 = vrot.lane.b32.xlu0 %v858, 124
        %v874 = vpop.permute.xlu0 %873
        %v883 = vadd.f32 %v766, %v860
        %v884 = vadd.f32 %v767, %v862
        %v885 = vadd.f32 %v768, %v864
        %v886 = vadd.f32 %v769, %v866
        %v887 = vadd.f32 %v770, %v868
        %v888 = vadd.f32 %v771, %v870
        %v889 = vadd.f32 %v772, %v872
        %v890 = vadd.f32 %v773, %v874
        %s891 = scalar_lea.vmem %s1, 24
        %v892 = vld [vmem:[%s891] sm:$0x1]
        %v893 = vld [vmem:[%s891 + $0x1] sm:$0x1]
        %v894 = vld [vmem:[%s891 + $0x2] sm:$0x1]
        %v895 = vld [vmem:[%s891 + $0x3] sm:$0x1]
        %v900 = vlaneseq
        %v901 = vshrl.u32 %v900, 7
        %v902 = vsub.s32 0, %v901
        %v903 = vrot.slane %v892, %v902
        %v904 = vlaneseq
        %v905 = vshrl.u32 %v904, 7
        %v906 = vsub.s32 0, %v905
        %v907 = vrot.slane %v893, %v906
        %v908 = vlaneseq
        %v909 = vshrl.u32 %v908, 7
        %v910 = vsub.s32 0, %v909
        %v911 = vrot.slane %v894, %v910
        %v912 = vlaneseq
        %v913 = vshrl.u32 %v912, 7
        %v914 = vsub.s32 0, %v913
        %v915 = vrot.slane %v895, %v914
        %916 = vset.pattern.permute.xlu0 0
        %917 = vperm.xlu0 %916, %v903
        %v918 = vpop.permute.xlu0 %917
        %920 = vset.pattern.permute.xlu0 0
        %921 = vperm.xlu0 %920, %v907
        %v922 = vpop.permute.xlu0 %921
        %924 = vset.pattern.permute.xlu0 0
        %925 = vperm.xlu0 %924, %v911
        %v926 = vpop.permute.xlu0 %925
        %928 = vset.pattern.permute.xlu0 0
        %929 = vperm.xlu0 %928, %v915
        %v930 = vpop.permute.xlu0 %929
        %v932 = vmul.f32 %v309, %v918
        %v933 = vmul.f32 %v310, %v918
        %v934 = vmul.f32 %v311, %v918
        %v935 = vmul.f32 %v312, %v922
        %v936 = vmul.f32 %v313, %v922
        %v937 = vmul.f32 %v314, %v922
        %v938 = vmul.f32 %v315, %v926
        %v939 = vmul.f32 %v316, %v926
        %v940 = vmul.f32 %v317, %v926
        %v941 = vmul.f32 %v318, %v930
        %v942 = vmul.f32 %v319, %v930
        %v943 = vmul.f32 %v320, %v930
        %vm956 = vcmask 1043456
        %v957 = vrot.slane %v932, 4
        %v958 = vrot.slane %v933, 4
        %v959 = vsel %vm956, %v957, %v958
        %v960 = vrot.slane %v934, 4
        %v961 = vsel %vm956, %v958, %v960
        %v962 = vrot.slane %v935, 4
        %v963 = vrot.slane %v936, 4
        %v964 = vsel %vm956, %v962, %v963
        %v965 = vrot.slane %v937, 4
        %v966 = vsel %vm956, %v963, %v965
        %v967 = vrot.slane %v938, 4
        %v968 = vrot.slane %v939, 4
        %v969 = vsel %vm956, %v967, %v968
        %v970 = vrot.slane %v940, 4
        %v971 = vsel %vm956, %v968, %v970
        %v972 = vrot.slane %v941, 4
        %v973 = vrot.slane %v942, 4
        %v974 = vsel %vm956, %v972, %v973
        %v975 = vrot.slane %v943, 4
        %v976 = vsel %vm956, %v973, %v975
        %v985 = vadd.f32 %v883, %v959
        %v986 = vadd.f32 %v884, %v961
        %v987 = vadd.f32 %v885, %v964
        %v988 = vadd.f32 %v886, %v966
        %v989 = vadd.f32 %v887, %v969
        %v990 = vadd.f32 %v888, %v971
        %v991 = vadd.f32 %v889, %v974
        %v992 = vadd.f32 %v890, %v976
        %s993 = scalar_lea.vmem %s1, 28
        %v994 = vld [vmem:[%s993] sm:$0x1]
        %v995 = vld [vmem:[%s993 + $0x1] sm:$0x1]
        %v996 = vld [vmem:[%s993 + $0x2] sm:$0x1]
        %v997 = vld [vmem:[%s993 + $0x3] sm:$0x1]
        %v1002 = vlaneseq
        %v1003 = vshrl.u32 %v1002, 7
        %v1004 = vsub.s32 0, %v1003
        %v1005 = vrot.slane %v994, %v1004
        %v1006 = vlaneseq
        %v1007 = vshrl.u32 %v1006, 7
        %v1008 = vsub.s32 0, %v1007
        %v1009 = vrot.slane %v995, %v1008
        %v1010 = vlaneseq
        %v1011 = vshrl.u32 %v1010, 7
        %v1012 = vsub.s32 0, %v1011
        %v1013 = vrot.slane %v996, %v1012
        %v1014 = vlaneseq
        %v1015 = vshrl.u32 %v1014, 7
        %v1016 = vsub.s32 0, %v1015
        %v1017 = vrot.slane %v997, %v1016
        %1018 = vset.pattern.permute.xlu0 0
        %1019 = vperm.xlu0 %1018, %v1005
        %v1020 = vpop.permute.xlu0 %1019
        %1022 = vset.pattern.permute.xlu0 0
        %1023 = vperm.xlu0 %1022, %v1009
        %v1024 = vpop.permute.xlu0 %1023
        %1026 = vset.pattern.permute.xlu0 0
        %1027 = vperm.xlu0 %1026, %v1013
        %v1028 = vpop.permute.xlu0 %1027
        %1030 = vset.pattern.permute.xlu0 0
        %1031 = vperm.xlu0 %1030, %v1017
        %v1032 = vpop.permute.xlu0 %1031
        %v1034 = vmul.f32 %v309, %v1020
        %v1035 = vmul.f32 %v310, %v1020
        %v1036 = vmul.f32 %v311, %v1020
        %v1037 = vmul.f32 %v312, %v1024
        %v1038 = vmul.f32 %v313, %v1024
        %v1039 = vmul.f32 %v314, %v1024
        %v1040 = vmul.f32 %v315, %v1028
        %v1041 = vmul.f32 %v316, %v1028
        %v1042 = vmul.f32 %v317, %v1028
        %v1043 = vmul.f32 %v318, %v1032
        %v1044 = vmul.f32 %v319, %v1032
        %v1045 = vmul.f32 %v320, %v1032
        %v1058 = vrot.slane %v1034, 4
        %v1059 = vrot.slane %v1035, 4
        %v1060 = vsel %vm956, %v1058, %v1059
        %v1061 = vrot.slane %v1036, 4
        %v1062 = vsel %vm956, %v1059, %v1061
        %v1063 = vrot.slane %v1037, 4
        %v1064 = vrot.slane %v1038, 4
        %v1065 = vsel %vm956, %v1063, %v1064
        %v1066 = vrot.slane %v1039, 4
        %v1067 = vsel %vm956, %v1064, %v1066
        %v1068 = vrot.slane %v1040, 4
        %v1069 = vrot.slane %v1041, 4
        %v1070 = vsel %vm956, %v1068, %v1069
        %v1071 = vrot.slane %v1042, 4
        %v1072 = vsel %vm956, %v1069, %v1071
        %v1073 = vrot.slane %v1043, 4
        %v1074 = vrot.slane %v1044, 4
        %v1075 = vsel %vm956, %v1073, %v1074
        %v1076 = vrot.slane %v1045, 4
        %v1077 = vsel %vm956, %v1074, %v1076
        %1078 = vrot.lane.b32.xlu0 %v1060, 126
        %v1079 = vpop.permute.xlu0 %1078
        %1080 = vrot.lane.b32.xlu0 %v1062, 126
        %v1081 = vpop.permute.xlu0 %1080
        %1082 = vrot.lane.b32.xlu0 %v1065, 126
        %v1083 = vpop.permute.xlu0 %1082
        %1084 = vrot.lane.b32.xlu0 %v1067, 126
        %v1085 = vpop.permute.xlu0 %1084
        %1086 = vrot.lane.b32.xlu0 %v1070, 126
        %v1087 = vpop.permute.xlu0 %1086
        %1088 = vrot.lane.b32.xlu0 %v1072, 126
        %v1089 = vpop.permute.xlu0 %1088
        %1090 = vrot.lane.b32.xlu0 %v1075, 126
        %v1091 = vpop.permute.xlu0 %1090
        %1092 = vrot.lane.b32.xlu0 %v1077, 126
        %v1093 = vpop.permute.xlu0 %1092
        %v1102 = vadd.f32 %v985, %v1079
        %v1103 = vadd.f32 %v986, %v1081
        %v1104 = vadd.f32 %v987, %v1083
        %v1105 = vadd.f32 %v988, %v1085
        %v1106 = vadd.f32 %v989, %v1087
        %v1107 = vadd.f32 %v990, %v1089
        %v1108 = vadd.f32 %v991, %v1091
        %v1109 = vadd.f32 %v992, %v1093
        %s1110 = scalar_lea.vmem %s1, 32
        %v1111 = vld [vmem:[%s1110] sm:$0x1]
        %v1112 = vld [vmem:[%s1110 + $0x1] sm:$0x1]
        %v1113 = vld [vmem:[%s1110 + $0x2] sm:$0x1]
        %v1114 = vld [vmem:[%s1110 + $0x3] sm:$0x1]
        %v1119 = vlaneseq
        %v1120 = vshrl.u32 %v1119, 7
        %v1121 = vsub.s32 0, %v1120
        %v1122 = vrot.slane %v1111, %v1121
        %v1123 = vlaneseq
        %v1124 = vshrl.u32 %v1123, 7
        %v1125 = vsub.s32 0, %v1124
        %v1126 = vrot.slane %v1112, %v1125
        %v1127 = vlaneseq
        %v1128 = vshrl.u32 %v1127, 7
        %v1129 = vsub.s32 0, %v1128
        %v1130 = vrot.slane %v1113, %v1129
        %v1131 = vlaneseq
        %v1132 = vshrl.u32 %v1131, 7
        %v1133 = vsub.s32 0, %v1132
        %v1134 = vrot.slane %v1114, %v1133
        %1135 = vset.pattern.permute.xlu0 0
        %1136 = vperm.xlu0 %1135, %v1122
        %v1137 = vpop.permute.xlu0 %1136
        %1139 = vset.pattern.permute.xlu0 0
        %1140 = vperm.xlu0 %1139, %v1126
        %v1141 = vpop.permute.xlu0 %1140
        %1143 = vset.pattern.permute.xlu0 0
        %1144 = vperm.xlu0 %1143, %v1130
        %v1145 = vpop.permute.xlu0 %1144
        %1147 = vset.pattern.permute.xlu0 0
        %1148 = vperm.xlu0 %1147, %v1134
        %v1149 = vpop.permute.xlu0 %1148
        %v1151 = vmul.f32 %v309, %v1137
        %v1152 = vmul.f32 %v310, %v1137
        %v1153 = vmul.f32 %v311, %v1137
        %v1154 = vmul.f32 %v312, %v1141
        %v1155 = vmul.f32 %v313, %v1141
        %v1156 = vmul.f32 %v314, %v1141
        %v1157 = vmul.f32 %v315, %v1145
        %v1158 = vmul.f32 %v316, %v1145
        %v1159 = vmul.f32 %v317, %v1145
        %v1160 = vmul.f32 %v318, %v1149
        %v1161 = vmul.f32 %v319, %v1149
        %v1162 = vmul.f32 %v320, %v1149
        %v1175 = vrot.slane %v1151, 4
        %v1176 = vrot.slane %v1152, 4
        %v1177 = vsel %vm956, %v1175, %v1176
        %v1178 = vrot.slane %v1153, 4
        %v1179 = vsel %vm956, %v1176, %v1178
        %v1180 = vrot.slane %v1154, 4
        %v1181 = vrot.slane %v1155, 4
        %v1182 = vsel %vm956, %v1180, %v1181
        %v1183 = vrot.slane %v1156, 4
        %v1184 = vsel %vm956, %v1181, %v1183
        %v1185 = vrot.slane %v1157, 4
        %v1186 = vrot.slane %v1158, 4
        %v1187 = vsel %vm956, %v1185, %v1186
        %v1188 = vrot.slane %v1159, 4
        %v1189 = vsel %vm956, %v1186, %v1188
        %v1190 = vrot.slane %v1160, 4
        %v1191 = vrot.slane %v1161, 4
        %v1192 = vsel %vm956, %v1190, %v1191
        %v1193 = vrot.slane %v1162, 4
        %v1194 = vsel %vm956, %v1191, %v1193
        %1195 = vrot.lane.b32.xlu0 %v1177, 124
        %v1196 = vpop.permute.xlu0 %1195
        %1197 = vrot.lane.b32.xlu0 %v1179, 124
        %v1198 = vpop.permute.xlu0 %1197
        %1199 = vrot.lane.b32.xlu0 %v1182, 124
        %v1200 = vpop.permute.xlu0 %1199
        %1201 = vrot.lane.b32.xlu0 %v1184, 124
        %v1202 = vpop.permute.xlu0 %1201
        %1203 = vrot.lane.b32.xlu0 %v1187, 124
        %v1204 = vpop.permute.xlu0 %1203
        %1205 = vrot.lane.b32.xlu0 %v1189, 124
        %v1206 = vpop.permute.xlu0 %1205
        %1207 = vrot.lane.b32.xlu0 %v1192, 124
        %v1208 = vpop.permute.xlu0 %1207
        %1209 = vrot.lane.b32.xlu0 %v1194, 124
        %v1210 = vpop.permute.xlu0 %1209
        %v1219 = vadd.f32 %v1102, %v1196
        %v1220 = vadd.f32 %v1103, %v1198
        %v1221 = vadd.f32 %v1104, %v1200
        %v1222 = vadd.f32 %v1105, %v1202
        %v1223 = vadd.f32 %v1106, %v1204
        %v1224 = vadd.f32 %v1107, %v1206
        %v1225 = vadd.f32 %v1108, %v1208
        %v1226 = vadd.f32 %v1109, %v1210
        %v1231 = vrot.slane %v1221, 7
        %vm1232 = vcmask 1041409
        %v1233 = vsel %vm1232, %v1231, %v1219
        %vm1234 = vcmask 1045509
        %v1235 = vsel %vm1234, %v1231, %v1233
        %v1236 = vrot.slane %v1223, 6
        %vm1237 = vcmask 1042434
        %v1238 = vsel %vm1237, %v1236, %v1235
        %vm1239 = vcmask 1046534
        %v1240 = vsel %vm1239, %v1236, %v1238
        %v1241 = vrot.slane %v1225, 5
        %vm1242 = vcmask 1043459
        %v1243 = vsel %vm1242, %v1241, %v1240
        %vm1244 = vcmask 1047559
        %v1245 = vsel %vm1244, %v1241, %v1243
        %vm1247 = vcmask 125952
        %1248 = vst.msk [vmem:[#allocation3] sm:$0xf] %vm1247, %v1245
        %v1249 = vrot.slane %v1219, 1
        %v1250 = vsel %vm1232, %v1221, %v1249
        %v1251 = vsel %vm1234, %v1221, %v1250
        %v1252 = vrot.slane %v1223, 7
        %v1253 = vsel %vm1237, %v1252, %v1251
        %v1254 = vsel %vm1239, %v1252, %v1253
        %v1255 = vrot.slane %v1225, 6
        %v1256 = vsel %vm1242, %v1255, %v1254
        %v1257 = vsel %vm1244, %v1255, %v1256
        %1258 = vrot.lane.b32.xlu0 %v1257, 16
        %v1259 = vpop.permute.xlu0 %1258
        %vm1261 = vcmask 257152
        %1262 = vst.msk [vmem:[#allocation3] sm:$0xf] %vm1261, %v1259
        %v1263 = vrot.slane %v1219, 2
        %v1264 = vrot.slane %v1221, 1
        %v1265 = vsel %vm1232, %v1264, %v1263
        %v1266 = vsel %vm1234, %v1264, %v1265
        %v1267 = vsel %vm1237, %v1223, %v1266
        %v1268 = vsel %vm1239, %v1223, %v1267
        %v1269 = vrot.slane %v1225, 7
        %v1270 = vsel %vm1242, %v1269, %v1268
        %v1271 = vsel %vm1244, %v1269, %v1270
        %1272 = vrot.lane.b32.xlu0 %v1271, 32
        %v1273 = vpop.permute.xlu0 %1272
        %vm1275 = vcmask 388352
        %1276 = vst.msk [vmem:[#allocation3] sm:$0xf] %vm1275, %v1273
        %v1277 = vrot.slane %v1219, 3
        %v1278 = vrot.slane %v1221, 2
        %v1279 = vsel %vm1232, %v1278, %v1277
        %v1280 = vsel %vm1234, %v1278, %v1279
        %v1281 = vrot.slane %v1223, 1
        %v1282 = vsel %vm1237, %v1281, %v1280
        %v1283 = vsel %vm1239, %v1281, %v1282
        %v1284 = vsel %vm1242, %v1225, %v1283
        %v1285 = vsel %vm1244, %v1225, %v1284
        %1286 = vrot.lane.b32.xlu0 %v1285, 48
        %v1287 = vpop.permute.xlu0 %1286
        %vm1289 = vcmask 519552
        %1290 = vst.msk [vmem:[#allocation3] sm:$0xf] %vm1289, %v1287
        %v1291 = vcombine.high %v1219, %v1219
        %v1292 = vcombine.high %v1221, %v1221
        %v1293 = vcombine.high %v1223, %v1223
        %v1294 = vcombine.high %v1225, %v1225
        %v1295 = vrot.slane %v1292, 7
        %v1296 = vsel %vm1232, %v1295, %v1291
        %v1297 = vsel %vm1234, %v1295, %v1296
        %v1298 = vrot.slane %v1293, 6
        %v1299 = vsel %vm1237, %v1298, %v1297
        %v1300 = vsel %vm1239, %v1298, %v1299
        %v1301 = vrot.slane %v1294, 5
        %v1302 = vsel %vm1242, %v1301, %v1300
        %v1303 = vsel %vm1244, %v1301, %v1302
        %1304 = vrot.lane.b32.xlu0 %v1303, 64
        %v1305 = vpop.permute.xlu0 %1304
        %vm1307 = vcmask 650752
        %1308 = vst.msk [vmem:[#allocation3] sm:$0xf] %vm1307, %v1305
        %v1309 = vrot.slane %v1291, 1
        %v1310 = vsel %vm1232, %v1292, %v1309
        %v1311 = vsel %vm1234, %v1292, %v1310
        %v1312 = vrot.slane %v1293, 7
        %v1313 = vsel %vm1237, %v1312, %v1311
        %v1314 = vsel %vm1239, %v1312, %v1313
        %v1315 = vrot.slane %v1294, 6
        %v1316 = vsel %vm1242, %v1315, %v1314
        %v1317 = vsel %vm1244, %v1315, %v1316
        %1318 = vrot.lane.b32.xlu0 %v1317, 80
        %v1319 = vpop.permute.xlu0 %1318
        %vm1321 = vcmask 781952
        %1322 = vst.msk [vmem:[#allocation3] sm:$0xf] %vm1321, %v1319
        %v1323 = vrot.slane %v1291, 2
        %v1324 = vrot.slane %v1292, 1
        %v1325 = vsel %vm1232, %v1324, %v1323
        %v1326 = vsel %vm1234, %v1324, %v1325
        %v1327 = vsel %vm1237, %v1293, %v1326
        %v1328 = vsel %vm1239, %v1293, %v1327
        %v1329 = vrot.slane %v1294, 7
        %v1330 = vsel %vm1242, %v1329, %v1328
        %v1331 = vsel %vm1244, %v1329, %v1330
        %1332 = vrot.lane.b32.xlu0 %v1331, 96
        %v1333 = vpop.permute.xlu0 %1332
        %vm1335 = vcmask 913152
        %1336 = vst.msk [vmem:[#allocation3] sm:$0xf] %vm1335, %v1333
        %v1337 = vrot.slane %v1291, 3
        %v1338 = vrot.slane %v1292, 2
        %v1339 = vsel %vm1232, %v1338, %v1337
        %v1340 = vsel %vm1234, %v1338, %v1339
        %v1341 = vrot.slane %v1293, 1
        %v1342 = vsel %vm1237, %v1341, %v1340
        %v1343 = vsel %vm1239, %v1341, %v1342
        %v1344 = vsel %vm1242, %v1294, %v1343
        %v1345 = vsel %vm1244, %v1294, %v1344
        %1346 = vrot.lane.b32.xlu0 %v1345, 112
        %v1347 = vpop.permute.xlu0 %1346
        %vm1349 = vcmask 1044352
        %1350 = vst.msk [vmem:[#allocation3] sm:$0xf] %vm1349, %v1347
        %v1355 = vrot.slane %v1222, 7
        %v1356 = vsel %vm1232, %v1355, %v1220
        %v1357 = vsel %vm1234, %v1355, %v1356
        %v1358 = vrot.slane %v1224, 6
        %v1359 = vsel %vm1237, %v1358, %v1357
        %v1360 = vsel %vm1239, %v1358, %v1359
        %v1361 = vrot.slane %v1226, 5
        %v1362 = vsel %vm1242, %v1361, %v1360
        %v1363 = vsel %vm1244, %v1361, %v1362
        %1365 = vst.msk [vmem:[#allocation3 + $0x4] sm:$0xf] %vm1247, %v1363
        %v1366 = vrot.slane %v1220, 1
        %v1367 = vsel %vm1232, %v1222, %v1366
        %v1368 = vsel %vm1234, %v1222, %v1367
        %v1369 = vrot.slane %v1224, 7
        %v1370 = vsel %vm1237, %v1369, %v1368
        %v1371 = vsel %vm1239, %v1369, %v1370
        %v1372 = vrot.slane %v1226, 6
        %v1373 = vsel %vm1242, %v1372, %v1371
        %v1374 = vsel %vm1244, %v1372, %v1373
        %1375 = vrot.lane.b32.xlu0 %v1374, 16
        %v1376 = vpop.permute.xlu0 %1375
        %1378 = vst.msk [vmem:[#allocation3 + $0x4] sm:$0xf] %vm1261, %v1376
        %v1379 = vrot.slane %v1220, 2
        %v1380 = vrot.slane %v1222, 1
        %v1381 = vsel %vm1232, %v1380, %v1379
        %v1382 = vsel %vm1234, %v1380, %v1381
        %v1383 = vsel %vm1237, %v1224, %v1382
        %v1384 = vsel %vm1239, %v1224, %v1383
        %v1385 = vrot.slane %v1226, 7
        %v1386 = vsel %vm1242, %v1385, %v1384
        %v1387 = vsel %vm1244, %v1385, %v1386
        %1388 = vrot.lane.b32.xlu0 %v1387, 32
        %v1389 = vpop.permute.xlu0 %1388
        %1391 = vst.msk [vmem:[#allocation3 + $0x4] sm:$0xf] %vm1275, %v1389
        %v1392 = vrot.slane %v1220, 3
        %v1393 = vrot.slane %v1222, 2
        %v1394 = vsel %vm1232, %v1393, %v1392
        %v1395 = vsel %vm1234, %v1393, %v1394
        %v1396 = vrot.slane %v1224, 1
        %v1397 = vsel %vm1237, %v1396, %v1395
        %v1398 = vsel %vm1239, %v1396, %v1397
        %v1399 = vsel %vm1242, %v1226, %v1398
        %v1400 = vsel %vm1244, %v1226, %v1399
        %1401 = vrot.lane.b32.xlu0 %v1400, 48
        %v1402 = vpop.permute.xlu0 %1401
        %1404 = vst.msk [vmem:[#allocation3 + $0x4] sm:$0xf] %vm1289, %v1402
        %v1405 = vcombine.high %v1220, %v1220
        %v1406 = vcombine.high %v1222, %v1222
        %v1407 = vcombine.high %v1224, %v1224
        %v1408 = vcombine.high %v1226, %v1226
        %v1409 = vrot.slane %v1406, 7
        %v1410 = vsel %vm1232, %v1409, %v1405
        %v1411 = vsel %vm1234, %v1409, %v1410
        %v1412 = vrot.slane %v1407, 6
        %v1413 = vsel %vm1237, %v1412, %v1411
        %v1414 = vsel %vm1239, %v1412, %v1413
        %v1415 = vrot.slane %v1408, 5
        %v1416 = vsel %vm1242, %v1415, %v1414
        %v1417 = vsel %vm1244, %v1415, %v1416
        %1418 = vrot.lane.b32.xlu0 %v1417, 64
        %v1419 = vpop.permute.xlu0 %1418
        %1421 = vst.msk [vmem:[#allocation3 + $0x4] sm:$0xf] %vm1307, %v1419
        %v1422 = vrot.slane %v1405, 1
        %v1423 = vsel %vm1232, %v1406, %v1422
        %v1424 = vsel %vm1234, %v1406, %v1423
        %v1425 = vrot.slane %v1407, 7
        %v1426 = vsel %vm1237, %v1425, %v1424
        %v1427 = vsel %vm1239, %v1425, %v1426
        %v1428 = vrot.slane %v1408, 6
        %v1429 = vsel %vm1242, %v1428, %v1427
        %v1430 = vsel %vm1244, %v1428, %v1429
        %1431 = vrot.lane.b32.xlu0 %v1430, 80
        %v1432 = vpop.permute.xlu0 %1431
        %1434 = vst.msk [vmem:[#allocation3 + $0x4] sm:$0xf] %vm1321, %v1432
        %v1435 = vrot.slane %v1405, 2
        %v1436 = vrot.slane %v1406, 1
        %v1437 = vsel %vm1232, %v1436, %v1435
        %v1438 = vsel %vm1234, %v1436, %v1437
        %v1439 = vsel %vm1237, %v1407, %v1438
        %v1440 = vsel %vm1239, %v1407, %v1439
        %v1441 = vrot.slane %v1408, 7
        %v1442 = vsel %vm1242, %v1441, %v1440
        %v1443 = vsel %vm1244, %v1441, %v1442
        %1444 = vrot.lane.b32.xlu0 %v1443, 96
        %v1445 = vpop.permute.xlu0 %1444
        %1447 = vst.msk [vmem:[#allocation3 + $0x4] sm:$0xf] %vm1335, %v1445
        %v1448 = vrot.slane %v1405, 3
        %v1449 = vrot.slane %v1406, 2
        %v1450 = vsel %vm1232, %v1449, %v1448
        %v1451 = vsel %vm1234, %v1449, %v1450
        %v1452 = vrot.slane %v1407, 1
        %v1453 = vsel %vm1237, %v1452, %v1451
        %v1454 = vsel %vm1239, %v1452, %v1453
        %v1455 = vsel %vm1242, %v1408, %v1454
        %v1456 = vsel %vm1244, %v1408, %v1455
        %1457 = vrot.lane.b32.xlu0 %v1456, 112
        %v1458 = vpop.permute.xlu0 %1457
        %1460 = vst.msk [vmem:[#allocation3 + $0x4] sm:$0xf] %vm1349, %v1458
        %v1461 = vld [vmem:[#allocation3] sm:$0xff]
        %v1463 = vcombine.high %v1461, %v1461
        %vm1464 = vcmask 31744
        %v1466 = vsel %vm1464, %v243, 0
        %v1468 = vsel %vm956, %v1461, 0
        %v1470 = vsel %vm956, %v1463, 0
        %1472 = vmatprep.subr.mxu0 0.0
        %1473 = vmatpush1.msra.mxu0 0.0
        %1474 = vmatprep.subr.mxu0 0.0
        %1475 = vmatpush1.msra.mxu0 0.0
        %1476 = vmatprep.subr.mxu0 0.0
        %1477 = vmatpush1.msra.mxu0 0.0
        %1478 = vmatprep.subr.mxu0 0.0
        %1479 = vmatpush1.msra.mxu0 0.0
        %1480 = vmatprep.subr.mxu0 0.0
        %1481 = vmatpush1.msra.mxu0 0.0
        %1482 = vmatprep.subr.mxu0 0.0
        %1483 = vmatpush1.msra.mxu0 0.0
        %1484 = vmatprep.subr.mxu0 0.0
        %1485 = vmatpush1.msra.mxu0 0.0
        %1486 = vmatprep.subr.mxu0 0.0
        %1487 = vmatpush1.msra.mxu0 0.0
        %1488 = vmatprep.subr.mxu0 0.0
        %1489 = vmatpush1.msra.mxu0 0.0
        %1490 = vmatprep.subr.mxu0 0.0
        %1491 = vmatpush1.msra.mxu0 0.0
        %1492 = vmatprep.subr.mxu0 0.0
        %1493 = vmatpush1.msra.mxu0 0.0
        %1494 = vmatprep.subr.mxu0 0.0
        %1495 = vmatpush1.msra.mxu0 0.0
        %1496 = vmatprep.subr.mxu0 0.0
        %1497 = vmatpush1.msra.mxu0 0.0
        %1498 = vmatprep.subr.mxu0 0.0
        %1499 = vmatpush1.msra.mxu0 0.0
        %1500 = vmatprep.subr.mxu0 0.0
        %1501 = vmatpush1.msra.mxu0 0.0
        %1502 = vmatprep.subr.mxu0 %v1470
        %1503 = vmatpush1.msra.mxu0 %v1468
        %1504 = vmatprep.subr.mxu0 0.0
        %1505 = vmatpush2.msra.mxu0 0.0
        %1506 = vmatprep.subr.mxu0 0.0
        %1507 = vmatpush2.msra.mxu0 0.0
        %1508 = vmatprep.subr.mxu0 0.0
        %1509 = vmatpush2.msra.mxu0 0.0
        %1510 = vmatprep.subr.mxu0 0.0
        %1511 = vmatpush2.msra.mxu0 0.0
        %1512 = vmatprep.subr.mxu0 0.0
        %1513 = vmatpush2.msra.mxu0 0.0
        %1514 = vmatprep.subr.mxu0 0.0
        %1515 = vmatpush2.msra.mxu0 0.0
        %1516 = vmatprep.subr.mxu0 0.0
        %1517 = vmatpush2.msra.mxu0 0.0
        %1518 = vmatprep.subr.mxu0 0.0
        %1519 = vmatpush2.msra.mxu0 0.0
        %1520 = vmatprep.subr.mxu0 0.0
        %1521 = vmatpush2.msra.mxu0 0.0
        %1522 = vmatprep.subr.mxu0 0.0
        %1523 = vmatpush2.msra.mxu0 0.0
        %1524 = vmatprep.subr.mxu0 0.0
        %1525 = vmatpush2.msra.mxu0 0.0
        %1526 = vmatprep.subr.mxu0 0.0
        %1527 = vmatpush2.msra.mxu0 0.0
        %1528 = vmatprep.subr.mxu0 0.0
        %1529 = vmatpush2.msra.mxu0 0.0
        %1530 = vmatprep.subr.mxu0 0.0
        %1531 = vmatpush2.msra.mxu0 0.0
        %1532 = vmatprep.subr.mxu0 0.0
        %1533 = vmatpush2.msra.mxu0 0.0
        %1534 = vmatprep.subr.mxu0 0.0
        %1535 = vmatpush2.msra.mxu0 0.0
        %1536 = vmatprep.mubr.f32.mxu0 0.0
        %1537 = vmatmul.mubr.f32.gmra.mxu0 %v1466
        %v1538 = vpop.f32.mrf.mxu0
        %v1539 = vadd.f32 0.0, %v1538
        %v1540 = vpop.f32.mrf.mxu0
        %v1541 = vadd.f32 0.0, %v1540
        %1542 = vdwg.mxu0
        %1544 = vset.pattern.permute.xlu0 0
        %1545 = vperm.xlu0 %1544, %v244
        %v1546 = vpop.permute.xlu0 %1545
        %v1548 = vmul.f32 %v1539, %v1546
        %v1549 = vmul.f32 %v1541, %v1546
        %1551 = vset.pattern.permute.xlu0 0
        %1552 = vperm.xlu0 %1551, %v245
        %v1553 = vpop.permute.xlu0 %1552
        %v1555 = vadd.f32 %v1548, %v1553
        %v1556 = vadd.f32 %v1549, %v1553
        %v1557 = vmax.f32 %v1555, 0.0
        %v1558 = vmax.f32 %v1556, 0.0
        %1559 = vst [vmem:[%s242] sm:$0xff] %v1557
        %1560 = vst [vmem:[%s242 + $0x8] sm:$0xff] %v1558
        %s1561 = sand.u32 %s140, 1
        %s1562 = scalar_lea.sflag [#allocation6], %s1561
        %s1563 = sand.u32 %s140, 1
        %s1564 = smul.addr %s1563, 16
        %s1565 = scalar_lea.vmem [#allocation7], %s1564
        // Predicated region
        $region45: #{tpu_custom_call.1} parent=39 // pred_check
          %p1566 = pneg %p150
        $region46: #{tpu_custom_call.1} parent=39 // pred_check_branch
          %1568 = sbr.rel (%p1566) target = $region48
        $region47: #{tpu_custom_call.1} parent=39 // pred_region
          %s1570 = ssub.s32 256, 256
          %1571 = vsyncadd %s1562, %s1570
          %s1572 = smul.addr %s22, 2
          %s1573 = smul.addr %s1572, 128
          %s1574 = scalar_lea.hbm %s5, %s1573
          %s1576 = sshll.u32 %s1565, 4
          %s1577 = int_to_ptr.vmem [resolvable:$true] %s1576
          %1579 = dma.vmem_to_hbm [thread:$0]  %s1577, 256, %s1574, %s1562
        $region48: #{tpu_custom_call.1} parent=39 // pred_fallthru
          _
      $region40: #{tpu_custom_call.1} parent=5 // pred_fallthru
        _
      %p1580 = scmp.le.s32.totalorder 2, %s17
      // Predicated region
      $region49: #{tpu_custom_call.1} parent=5 // pred_check
        %p1581 = pneg %p1580
      $region50: #{tpu_custom_call.1} parent=5 // pred_check_branch
        %1583 = sbr.rel (%p1581) target = $region52
      $region51: #{tpu_custom_call.1} parent=5 // pred_region
        %s1584 = ssub.s32 %s17, 2
        // Predicated region
        $region53: #{tpu_custom_call.1} parent=51 // pred_check
          %p1585 = pneg %p156
        $region54: #{tpu_custom_call.1} parent=51 // pred_check_branch
          %1587 = sbr.rel (%p1585) target = $region56
        $region55: #{tpu_custom_call.1} parent=51 // pred_region
          %s1588 = sand.u32 %s141, 1
          %s1589 = scalar_lea.sflag [#allocation6], %s1588
          %s1590 = sand.u32 %s141, 1
          %s1591 = smul.addr %s1590, 16
          %s1592 = scalar_lea.vmem [#allocation7], %s1591
          %1593 = dma.done %s1589, 256
        $region56: #{tpu_custom_call.1} parent=51 // pred_fallthru
          _
      $region52: #{tpu_custom_call.1} parent=5 // pred_fallthru
        _
    $region6: #{tpu_custom_call.1} parent=1 // loop_footer
      %s21 = sadd.s32 1, %s17
    $region7: #{tpu_custom_call.1} parent=1 // loop_footer_branch
      %16 = sbr.rel target = $region3
    $region8: #{tpu_custom_call.1} parent=1 // loop_exit
      _
    %1594 = vsyncpa [#allocation5], 1
    %s1595 = scalar_lea.sflag [#allocation5], 1
    %1596 = vsyncpa %s1595, 1
    %1597 = vsyncpa [#allocation6], 1
    %s1598 = scalar_lea.sflag [#allocation6], 1
    %1599 = vsyncpa %s1598, 1

</llo_original>
